<compile_context>
chip_gen: v7x
topology: tpu7x:2x2x1
jax: 0.10.0
libtpu: 0.0.40
codegen_flags: <defaults>
</compile_context>

<pallas_src>
import jax
import jax.numpy as jnp
from jax.experimental import pallas as pl
from jax.experimental.pallas import tpu as pltpu


def _hiersoft_cbow_kernel(words_ref, path_ref, code_ref, u_hbm, v_hbm,
                          out_ref, u_buf, v_buf, dma_sems):
    # words_ref : SMEM (C,)   int32  context-word ids
    # path_ref  : SMEM (P,)   int32  huffman inner-node ids
    # code_ref  : VMEM (P,1)  f32    huffman code bits
    # u_hbm     : HBM  (nwords, E)   input-embedding table U (not auto-DMA'd)
    # v_hbm     : HBM  (hier_nodes, E) inner-node table V    (not auto-DMA'd)
    # out_ref   : VMEM (1,1)  f32    scalar log-likelihood
    # u_buf     : VMEM scratch (C,E) gathered U rows
    # v_buf     : VMEM scratch (P,E) gathered V rows
    # dma_sems  : DMA semaphores (C+P,)
    C = words_ref.shape[0]
    P = path_ref.shape[0]
    nwords = u_hbm.shape[0]
    hnodes = v_hbm.shape[0]

    # 1) Row-gather DMAs: issue all C + P copies up front so they overlap,
    #    then wait.  Indices are clamped so a bad id cannot address OOB HBM.
    copies = []
    for c in range(C):
        idx = jnp.clip(words_ref[c], 0, nwords - 1)
        cp = pltpu.make_async_copy(u_hbm.at[pl.ds(idx, 1), :],
                                   u_buf.at[pl.ds(c, 1), :],
                                   dma_sems.at[c])
        cp.start()
        copies.append(cp)
    for p in range(P):
        idx = jnp.clip(path_ref[p], 0, hnodes - 1)
        cp = pltpu.make_async_copy(v_hbm.at[pl.ds(idx, 1), :],
                                   v_buf.at[pl.ds(p, 1), :],
                                   dma_sems.at[C + p])
        cp.start()
        copies.append(cp)
    for cp in copies:
        cp.wait()

    # 2) xw = sum_c U[words[c]]  -- single tree reduction over the gathered
    #    (C, E) block (no C-deep serial add chain).
    xw = jnp.sum(u_buf[...].astype(jnp.float32), axis=0, keepdims=True)  # (1,E)

    # 3) scores_p = <xw, V[h_path[p]]>  -- VPU broadcast-mul + lane reduce
    #    (no MXU pass, no transpose/relayout).
    theta = v_buf[...].astype(jnp.float32)                    # (P, E)
    scores = jnp.sum(xw * theta, axis=1, keepdims=True)       # (P, 1)

    # 4) hcode*log(sigmoid(s)) + (1-hcode)*log(1-sigmoid(s))
    #      == -softplus((1 - 2*hcode) * s)     (stable; log1p/exp ride the EUP)
    sign = 1.0 - 2.0 * code_ref[...]                          # (P, 1)
    x = sign * scores
    loglik = -(jnp.maximum(x, 0.0) + jnp.log1p(jnp.exp(-jnp.abs(x))))

    out_ref[...] = jnp.sum(loglik, axis=0, keepdims=True)     # (1, 1)


def hiersoft_cbow_forward(u_emb, v_emb, words, h_code, h_path):
    """JAX/Pallas equivalent of HierSoft_CBOW.forward(words, h_code, h_path)."""
    C = words.shape[0]
    P = h_path.shape[0]
    E = u_emb.shape[1]

    words_i = words.astype(jnp.int32)
    path_i = h_path.astype(jnp.int32)
    hcode = h_code.astype(jnp.float32).reshape(P, 1)

    out = pl.pallas_call(
        _hiersoft_cbow_kernel,
        out_shape=jax.ShapeDtypeStruct((1, 1), jnp.float32),
        in_specs=[
            pl.BlockSpec(memory_space=pltpu.MemorySpace.SMEM),  # words   (C,)
            pl.BlockSpec(memory_space=pltpu.MemorySpace.SMEM),  # h_path  (P,)
            pl.BlockSpec(memory_space=pltpu.MemorySpace.VMEM),  # hcode   (P,1)
            pl.BlockSpec(memory_space=pl.ANY),                  # U table (HBM)
            pl.BlockSpec(memory_space=pl.ANY),                  # V table (HBM)
        ],
        out_specs=pl.BlockSpec(memory_space=pltpu.MemorySpace.VMEM),
        scratch_shapes=[
            pltpu.VMEM((C, E), u_emb.dtype),      # gathered U rows
            pltpu.VMEM((P, E), v_emb.dtype),      # gathered V rows
            pltpu.SemaphoreType.DMA((C + P,)),    # one sem per row DMA
        ],
        # VMEM footprint is a few KiB; explicit limit keeps this safe on the
        # 64 MiB-VMEM v7x as well as v5e/v6e.
        compiler_params=pltpu.CompilerParams(vmem_limit_bytes=32 * 1024 * 1024),
    )(words_i, path_i, hcode, u_emb, v_emb)
    return out  # (1, 1), matching the PyTorch module's output shape


def xavier_normal(key, shape):
    fan_out, fan_in = shape  # embedding weight: (num_embeddings, emb_size)
    std = jnp.sqrt(2.0 / (fan_in + fan_out))
    return std * jax.random.normal(key, shape, dtype=jnp.float32)


if __name__ == "__main__":
    # Small synthetic problem consistent with the module.
    nwords, emb_size, hier_nodes = 100, 32, 50
    num_context, path_len = 8, 8

    key = jax.random.PRNGKey(0)
    ku, kv, kw, kp, kc = jax.random.split(key, 5)

    # Deterministic parameter init (xavier_normal, like the module's __init__).
    u_emb = xavier_normal(ku, (nwords, emb_size))
    v_emb = xavier_normal(kv, (hier_nodes, emb_size))

    # Inputs: context-word indices, huffman path indices, huffman code bits.
    words = jax.random.randint(kw, (num_context,), 0, nwords, dtype=jnp.int32)
    h_path = jax.random.randint(kp, (path_len,), 0, hier_nodes, dtype=jnp.int32)
    h_code = jax.random.randint(kc, (path_len,), 0, 2, dtype=jnp.int32)

    out = hiersoft_cbow_forward(u_emb, v_emb, words, h_code, h_path)
    out = jax.block_until_ready(out)

    # Pure-JAX reference of the original (sigmoid + log) formulation.
    embs = jnp.take(u_emb, words, axis=0)
    xw = jnp.sum(embs, axis=0, keepdims=True)
    theta = jnp.take(v_emb, h_path, axis=0).T
    z = jax.nn.sigmoid(xw @ theta)
    hc = h_code.astype(jnp.float32).reshape(-1, 1)
    ref = jnp.log(z) @ hc + jnp.log(1.0 - z) @ (1.0 - hc)

    assert out.shape == (1, 1)
    assert jnp.allclose(out, ref, atol=1e-5, rtol=1e-5)

    print("KERNEL_OK")
</pallas_src>

<mosaic_0001>
module attributes {stable_mosaic.version = 11 : i64} {
  func.func @_hiersoft_cbow_kernel(%arg0: memref<8xi32, #tpu.memory_space<smem>>, %arg1: memref<8xi32, #tpu.memory_space<smem>>, %arg2: memref<8x1xf32, #tpu.memory_space<vmem>>, %arg3: memref<100x32xf32, #tpu.memory_space<any>>, %arg4: memref<50x32xf32, #tpu.memory_space<any>>, %arg5: memref<1x1xf32, #tpu.memory_space<vmem>>, %arg6: memref<8x32xf32, #tpu.memory_space<vmem>>, %arg7: memref<8x32xf32, #tpu.memory_space<vmem>>, %arg8: memref<16x!tpu.dma_semaphore, #tpu.memory_space<semaphore_mem>>) attributes {dimension_semantics = [], scalar_prefetch = 0 : i64, scratch_operands = 3 : i64, tpu.core_type = #tpu.core_type<tc>} {
    %c0 = arith.constant 0 : index
    %0 = memref.load %arg0[%c0] : memref<8xi32, #tpu.memory_space<smem>>
    %c0_i32 = arith.constant 0 : i32
    %c99_i32 = arith.constant 99 : i32
    %1 = arith.maxsi %c0_i32, %0 : i32
    %2 = arith.minsi %c99_i32, %1 : i32
    %c0_i32_0 = arith.constant 0 : i32
    %c0_i32_1 = arith.constant 0 : i32
    %3 = tpu.memref_slice %arg3[%2, %c0_i32_1] : memref<100x32xf32, #tpu.memory_space<any>> -> memref<1x32xf32, #tpu.memory_space<any>>
    %c0_i32_2 = arith.constant 0 : i32
    %c0_i32_3 = arith.constant 0 : i32
    %4 = tpu.memref_slice %arg6[%c0_i32_2, %c0_i32_3] : memref<8x32xf32, #tpu.memory_space<vmem>> -> memref<1x32xf32, #tpu.memory_space<vmem>>
    %5 = tpu.memref_slice %arg8[%c0_i32_0] : memref<16x!tpu.dma_semaphore, #tpu.memory_space<semaphore_mem>> -> memref<1x!tpu.dma_semaphore, #tpu.memory_space<semaphore_mem>>
    %6 = tpu.memref_squeeze %5 : memref<1x!tpu.dma_semaphore, #tpu.memory_space<semaphore_mem>> -> memref<!tpu.dma_semaphore, #tpu.memory_space<semaphore_mem>>
    tpu.enqueue_dma source(%3 : memref<1x32xf32, #tpu.memory_space<any>>) target(%4 : memref<1x32xf32, #tpu.memory_space<vmem>>) target_semaphore(%6 : memref<!tpu.dma_semaphore, #tpu.memory_space<semaphore_mem>>)
    %c1 = arith.constant 1 : index
    %7 = memref.load %arg0[%c1] : memref<8xi32, #tpu.memory_space<smem>>
    %c0_i32_4 = arith.constant 0 : i32
    %c99_i32_5 = arith.constant 99 : i32
    %8 = arith.maxsi %c0_i32_4, %7 : i32
    %9 = arith.minsi %c99_i32_5, %8 : i32
    %c1_i32 = arith.constant 1 : i32
    %c0_i32_6 = arith.constant 0 : i32
    %10 = tpu.memref_slice %arg3[%9, %c0_i32_6] : memref<100x32xf32, #tpu.memory_space<any>> -> memref<1x32xf32, #tpu.memory_space<any>>
    %c1_i32_7 = arith.constant 1 : i32
    %c0_i32_8 = arith.constant 0 : i32
    %11 = tpu.memref_slice %arg6[%c1_i32_7, %c0_i32_8] : memref<8x32xf32, #tpu.memory_space<vmem>> -> memref<1x32xf32, #tpu.memory_space<vmem>>
    %12 = tpu.memref_slice %arg8[%c1_i32] : memref<16x!tpu.dma_semaphore, #tpu.memory_space<semaphore_mem>> -> memref<1x!tpu.dma_semaphore, #tpu.memory_space<semaphore_mem>>
    %13 = tpu.memref_squeeze %12 : memref<1x!tpu.dma_semaphore, #tpu.memory_space<semaphore_mem>> -> memref<!tpu.dma_semaphore, #tpu.memory_space<semaphore_mem>>
    tpu.enqueue_dma source(%10 : memref<1x32xf32, #tpu.memory_space<any>>) target(%11 : memref<1x32xf32, #tpu.memory_space<vmem>>) target_semaphore(%13 : memref<!tpu.dma_semaphore, #tpu.memory_space<semaphore_mem>>)
    %c2 = arith.constant 2 : index
    %14 = memref.load %arg0[%c2] : memref<8xi32, #tpu.memory_space<smem>>
    %c0_i32_9 = arith.constant 0 : i32
    %c99_i32_10 = arith.constant 99 : i32
    %15 = arith.maxsi %c0_i32_9, %14 : i32
    %16 = arith.minsi %c99_i32_10, %15 : i32
    %c2_i32 = arith.constant 2 : i32
    %c0_i32_11 = arith.constant 0 : i32
    %17 = tpu.memref_slice %arg3[%16, %c0_i32_11] : memref<100x32xf32, #tpu.memory_space<any>> -> memref<1x32xf32, #tpu.memory_space<any>>
    %c2_i32_12 = arith.constant 2 : i32
    %c0_i32_13 = arith.constant 0 : i32
    %18 = tpu.memref_slice %arg6[%c2_i32_12, %c0_i32_13] : memref<8x32xf32, #tpu.memory_space<vmem>> -> memref<1x32xf32, #tpu.memory_space<vmem>>
    %19 = tpu.memref_slice %arg8[%c2_i32] : memref<16x!tpu.dma_semaphore, #tpu.memory_space<semaphore_mem>> -> memref<1x!tpu.dma_semaphore, #tpu.memory_space<semaphore_mem>>
    %20 = tpu.memref_squeeze %19 : memref<1x!tpu.dma_semaphore, #tpu.memory_space<semaphore_mem>> -> memref<!tpu.dma_semaphore, #tpu.memory_space<semaphore_mem>>
    tpu.enqueue_dma source(%17 : memref<1x32xf32, #tpu.memory_space<any>>) target(%18 : memref<1x32xf32, #tpu.memory_space<vmem>>) target_semaphore(%20 : memref<!tpu.dma_semaphore, #tpu.memory_space<semaphore_mem>>)
    %c3 = arith.constant 3 : index
    %21 = memref.load %arg0[%c3] : memref<8xi32, #tpu.memory_space<smem>>
    %c0_i32_14 = arith.constant 0 : i32
    %c99_i32_15 = arith.constant 99 : i32
    %22 = arith.maxsi %c0_i32_14, %21 : i32
    %23 = arith.minsi %c99_i32_15, %22 : i32
    %c3_i32 = arith.constant 3 : i32
    %c0_i32_16 = arith.constant 0 : i32
    %24 = tpu.memref_slice %arg3[%23, %c0_i32_16] : memref<100x32xf32, #tpu.memory_space<any>> -> memref<1x32xf32, #tpu.memory_space<any>>
    %c3_i32_17 = arith.constant 3 : i32
    %c0_i32_18 = arith.constant 0 : i32
    %25 = tpu.memref_slice %arg6[%c3_i32_17, %c0_i32_18] : memref<8x32xf32, #tpu.memory_space<vmem>> -> memref<1x32xf32, #tpu.memory_space<vmem>>
    %26 = tpu.memref_slice %arg8[%c3_i32] : memref<16x!tpu.dma_semaphore, #tpu.memory_space<semaphore_mem>> -> memref<1x!tpu.dma_semaphore, #tpu.memory_space<semaphore_mem>>
    %27 = tpu.memref_squeeze %26 : memref<1x!tpu.dma_semaphore, #tpu.memory_space<semaphore_mem>> -> memref<!tpu.dma_semaphore, #tpu.memory_space<semaphore_mem>>
    tpu.enqueue_dma source(%24 : memref<1x32xf32, #tpu.memory_space<any>>) target(%25 : memref<1x32xf32, #tpu.memory_space<vmem>>) target_semaphore(%27 : memref<!tpu.dma_semaphore, #tpu.memory_space<semaphore_mem>>)
    %c4 = arith.constant 4 : index
    %28 = memref.load %arg0[%c4] : memref<8xi32, #tpu.memory_space<smem>>
    %c0_i32_19 = arith.constant 0 : i32
    %c99_i32_20 = arith.constant 99 : i32
    %29 = arith.maxsi %c0_i32_19, %28 : i32
    %30 = arith.minsi %c99_i32_20, %29 : i32
    %c4_i32 = arith.constant 4 : i32
    %c0_i32_21 = arith.constant 0 : i32
    %31 = tpu.memref_slice %arg3[%30, %c0_i32_21] : memref<100x32xf32, #tpu.memory_space<any>> -> memref<1x32xf32, #tpu.memory_space<any>>
    %c4_i32_22 = arith.constant 4 : i32
    %c0_i32_23 = arith.constant 0 : i32
    %32 = tpu.memref_slice %arg6[%c4_i32_22, %c0_i32_23] : memref<8x32xf32, #tpu.memory_space<vmem>> -> memref<1x32xf32, #tpu.memory_space<vmem>>
    %33 = tpu.memref_slice %arg8[%c4_i32] : memref<16x!tpu.dma_semaphore, #tpu.memory_space<semaphore_mem>> -> memref<1x!tpu.dma_semaphore, #tpu.memory_space<semaphore_mem>>
    %34 = tpu.memref_squeeze %33 : memref<1x!tpu.dma_semaphore, #tpu.memory_space<semaphore_mem>> -> memref<!tpu.dma_semaphore, #tpu.memory_space<semaphore_mem>>
    tpu.enqueue_dma source(%31 : memref<1x32xf32, #tpu.memory_space<any>>) target(%32 : memref<1x32xf32, #tpu.memory_space<vmem>>) target_semaphore(%34 : memref<!tpu.dma_semaphore, #tpu.memory_space<semaphore_mem>>)
    %c5 = arith.constant 5 : index
    %35 = memref.load %arg0[%c5] : memref<8xi32, #tpu.memory_space<smem>>
    %c0_i32_24 = arith.constant 0 : i32
    %c99_i32_25 = arith.constant 99 : i32
    %36 = arith.maxsi %c0_i32_24, %35 : i32
    %37 = arith.minsi %c99_i32_25, %36 : i32
    %c5_i32 = arith.constant 5 : i32
    %c0_i32_26 = arith.constant 0 : i32
    %38 = tpu.memref_slice %arg3[%37, %c0_i32_26] : memref<100x32xf32, #tpu.memory_space<any>> -> memref<1x32xf32, #tpu.memory_space<any>>
    %c5_i32_27 = arith.constant 5 : i32
    %c0_i32_28 = arith.constant 0 : i32
    %39 = tpu.memref_slice %arg6[%c5_i32_27, %c0_i32_28] : memref<8x32xf32, #tpu.memory_space<vmem>> -> memref<1x32xf32, #tpu.memory_space<vmem>>
    %40 = tpu.memref_slice %arg8[%c5_i32] : memref<16x!tpu.dma_semaphore, #tpu.memory_space<semaphore_mem>> -> memref<1x!tpu.dma_semaphore, #tpu.memory_space<semaphore_mem>>
    %41 = tpu.memref_squeeze %40 : memref<1x!tpu.dma_semaphore, #tpu.memory_space<semaphore_mem>> -> memref<!tpu.dma_semaphore, #tpu.memory_space<semaphore_mem>>
    tpu.enqueue_dma source(%38 : memref<1x32xf32, #tpu.memory_space<any>>) target(%39 : memref<1x32xf32, #tpu.memory_space<vmem>>) target_semaphore(%41 : memref<!tpu.dma_semaphore, #tpu.memory_space<semaphore_mem>>)
    %c6 = arith.constant 6 : index
    %42 = memref.load %arg0[%c6] : memref<8xi32, #tpu.memory_space<smem>>
    %c0_i32_29 = arith.constant 0 : i32
    %c99_i32_30 = arith.constant 99 : i32
    %43 = arith.maxsi %c0_i32_29, %42 : i32
    %44 = arith.minsi %c99_i32_30, %43 : i32
    %c6_i32 = arith.constant 6 : i32
    %c0_i32_31 = arith.constant 0 : i32
    %45 = tpu.memref_slice %arg3[%44, %c0_i32_31] : memref<100x32xf32, #tpu.memory_space<any>> -> memref<1x32xf32, #tpu.memory_space<any>>
    %c6_i32_32 = arith.constant 6 : i32
    %c0_i32_33 = arith.constant 0 : i32
    %46 = tpu.memref_slice %arg6[%c6_i32_32, %c0_i32_33] : memref<8x32xf32, #tpu.memory_space<vmem>> -> memref<1x32xf32, #tpu.memory_space<vmem>>
    %47 = tpu.memref_slice %arg8[%c6_i32] : memref<16x!tpu.dma_semaphore, #tpu.memory_space<semaphore_mem>> -> memref<1x!tpu.dma_semaphore, #tpu.memory_space<semaphore_mem>>
    %48 = tpu.memref_squeeze %47 : memref<1x!tpu.dma_semaphore, #tpu.memory_space<semaphore_mem>> -> memref<!tpu.dma_semaphore, #tpu.memory_space<semaphore_mem>>
    tpu.enqueue_dma source(%45 : memref<1x32xf32, #tpu.memory_space<any>>) target(%46 : memref<1x32xf32, #tpu.memory_space<vmem>>) target_semaphore(%48 : memref<!tpu.dma_semaphore, #tpu.memory_space<semaphore_mem>>)
    %c7 = arith.constant 7 : index
    %49 = memref.load %arg0[%c7] : memref<8xi32, #tpu.memory_space<smem>>
    %c0_i32_34 = arith.constant 0 : i32
    %c99_i32_35 = arith.constant 99 : i32
    %50 = arith.maxsi %c0_i32_34, %49 : i32
    %51 = arith.minsi %c99_i32_35, %50 : i32
    %c7_i32 = arith.constant 7 : i32
    %c0_i32_36 = arith.constant 0 : i32
    %52 = tpu.memref_slice %arg3[%51, %c0_i32_36] : memref<100x32xf32, #tpu.memory_space<any>> -> memref<1x32xf32, #tpu.memory_space<any>>
    %c7_i32_37 = arith.constant 7 : i32
    %c0_i32_38 = arith.constant 0 : i32
    %53 = tpu.memref_slice %arg6[%c7_i32_37, %c0_i32_38] : memref<8x32xf32, #tpu.memory_space<vmem>> -> memref<1x32xf32, #tpu.memory_space<vmem>>
    %54 = tpu.memref_slice %arg8[%c7_i32] : memref<16x!tpu.dma_semaphore, #tpu.memory_space<semaphore_mem>> -> memref<1x!tpu.dma_semaphore, #tpu.memory_space<semaphore_mem>>
    %55 = tpu.memref_squeeze %54 : memref<1x!tpu.dma_semaphore, #tpu.memory_space<semaphore_mem>> -> memref<!tpu.dma_semaphore, #tpu.memory_space<semaphore_mem>>
    tpu.enqueue_dma source(%52 : memref<1x32xf32, #tpu.memory_space<any>>) target(%53 : memref<1x32xf32, #tpu.memory_space<vmem>>) target_semaphore(%55 : memref<!tpu.dma_semaphore, #tpu.memory_space<semaphore_mem>>)
    %c0_39 = arith.constant 0 : index
    %56 = memref.load %arg1[%c0_39] : memref<8xi32, #tpu.memory_space<smem>>
    %c0_i32_40 = arith.constant 0 : i32
    %c49_i32 = arith.constant 49 : i32
    %57 = arith.maxsi %c0_i32_40, %56 : i32
    %58 = arith.minsi %c49_i32, %57 : i32
    %c8_i32 = arith.constant 8 : i32
    %c0_i32_41 = arith.constant 0 : i32
    %59 = tpu.memref_slice %arg4[%58, %c0_i32_41] : memref<50x32xf32, #tpu.memory_space<any>> -> memref<1x32xf32, #tpu.memory_space<any>>
    %c0_i32_42 = arith.constant 0 : i32
    %c0_i32_43 = arith.constant 0 : i32
    %60 = tpu.memref_slice %arg7[%c0_i32_42, %c0_i32_43] : memref<8x32xf32, #tpu.memory_space<vmem>> -> memref<1x32xf32, #tpu.memory_space<vmem>>
    %61 = tpu.memref_slice %arg8[%c8_i32] : memref<16x!tpu.dma_semaphore, #tpu.memory_space<semaphore_mem>> -> memref<1x!tpu.dma_semaphore, #tpu.memory_space<semaphore_mem>>
    %62 = tpu.memref_squeeze %61 : memref<1x!tpu.dma_semaphore, #tpu.memory_space<semaphore_mem>> -> memref<!tpu.dma_semaphore, #tpu.memory_space<semaphore_mem>>
    tpu.enqueue_dma source(%59 : memref<1x32xf32, #tpu.memory_space<any>>) target(%60 : memref<1x32xf32, #tpu.memory_space<vmem>>) target_semaphore(%62 : memref<!tpu.dma_semaphore, #tpu.memory_space<semaphore_mem>>)
    %c1_44 = arith.constant 1 : index
    %63 = memref.load %arg1[%c1_44] : memref<8xi32, #tpu.memory_space<smem>>
    %c0_i32_45 = arith.constant 0 : i32
    %c49_i32_46 = arith.constant 49 : i32
    %64 = arith.maxsi %c0_i32_45, %63 : i32
    %65 = arith.minsi %c49_i32_46, %64 : i32
    %c9_i32 = arith.constant 9 : i32
    %c0_i32_47 = arith.constant 0 : i32
    %66 = tpu.memref_slice %arg4[%65, %c0_i32_47] : memref<50x32xf32, #tpu.memory_space<any>> -> memref<1x32xf32, #tpu.memory_space<any>>
    %c1_i32_48 = arith.constant 1 : i32
    %c0_i32_49 = arith.constant 0 : i32
    %67 = tpu.memref_slice %arg7[%c1_i32_48, %c0_i32_49] : memref<8x32xf32, #tpu.memory_space<vmem>> -> memref<1x32xf32, #tpu.memory_space<vmem>>
    %68 = tpu.memref_slice %arg8[%c9_i32] : memref<16x!tpu.dma_semaphore, #tpu.memory_space<semaphore_mem>> -> memref<1x!tpu.dma_semaphore, #tpu.memory_space<semaphore_mem>>
    %69 = tpu.memref_squeeze %68 : memref<1x!tpu.dma_semaphore, #tpu.memory_space<semaphore_mem>> -> memref<!tpu.dma_semaphore, #tpu.memory_space<semaphore_mem>>
    tpu.enqueue_dma source(%66 : memref<1x32xf32, #tpu.memory_space<any>>) target(%67 : memref<1x32xf32, #tpu.memory_space<vmem>>) target_semaphore(%69 : memref<!tpu.dma_semaphore, #tpu.memory_space<semaphore_mem>>)
    %c2_50 = arith.constant 2 : index
    %70 = memref.load %arg1[%c2_50] : memref<8xi32, #tpu.memory_space<smem>>
    %c0_i32_51 = arith.constant 0 : i32
    %c49_i32_52 = arith.constant 49 : i32
    %71 = arith.maxsi %c0_i32_51, %70 : i32
    %72 = arith.minsi %c49_i32_52, %71 : i32
    %c10_i32 = arith.constant 10 : i32
    %c0_i32_53 = arith.constant 0 : i32
    %73 = tpu.memref_slice %arg4[%72, %c0_i32_53] : memref<50x32xf32, #tpu.memory_space<any>> -> memref<1x32xf32, #tpu.memory_space<any>>
    %c2_i32_54 = arith.constant 2 : i32
    %c0_i32_55 = arith.constant 0 : i32
    %74 = tpu.memref_slice %arg7[%c2_i32_54, %c0_i32_55] : memref<8x32xf32, #tpu.memory_space<vmem>> -> memref<1x32xf32, #tpu.memory_space<vmem>>
    %75 = tpu.memref_slice %arg8[%c10_i32] : memref<16x!tpu.dma_semaphore, #tpu.memory_space<semaphore_mem>> -> memref<1x!tpu.dma_semaphore, #tpu.memory_space<semaphore_mem>>
    %76 = tpu.memref_squeeze %75 : memref<1x!tpu.dma_semaphore, #tpu.memory_space<semaphore_mem>> -> memref<!tpu.dma_semaphore, #tpu.memory_space<semaphore_mem>>
    tpu.enqueue_dma source(%73 : memref<1x32xf32, #tpu.memory_space<any>>) target(%74 : memref<1x32xf32, #tpu.memory_space<vmem>>) target_semaphore(%76 : memref<!tpu.dma_semaphore, #tpu.memory_space<semaphore_mem>>)
    %c3_56 = arith.constant 3 : index
    %77 = memref.load %arg1[%c3_56] : memref<8xi32, #tpu.memory_space<smem>>
    %c0_i32_57 = arith.constant 0 : i32
    %c49_i32_58 = arith.constant 49 : i32
    %78 = arith.maxsi %c0_i32_57, %77 : i32
    %79 = arith.minsi %c49_i32_58, %78 : i32
    %c11_i32 = arith.constant 11 : i32
    %c0_i32_59 = arith.constant 0 : i32
    %80 = tpu.memref_slice %arg4[%79, %c0_i32_59] : memref<50x32xf32, #tpu.memory_space<any>> -> memref<1x32xf32, #tpu.memory_space<any>>
    %c3_i32_60 = arith.constant 3 : i32
    %c0_i32_61 = arith.constant 0 : i32
    %81 = tpu.memref_slice %arg7[%c3_i32_60, %c0_i32_61] : memref<8x32xf32, #tpu.memory_space<vmem>> -> memref<1x32xf32, #tpu.memory_space<vmem>>
    %82 = tpu.memref_slice %arg8[%c11_i32] : memref<16x!tpu.dma_semaphore, #tpu.memory_space<semaphore_mem>> -> memref<1x!tpu.dma_semaphore, #tpu.memory_space<semaphore_mem>>
    %83 = tpu.memref_squeeze %82 : memref<1x!tpu.dma_semaphore, #tpu.memory_space<semaphore_mem>> -> memref<!tpu.dma_semaphore, #tpu.memory_space<semaphore_mem>>
    tpu.enqueue_dma source(%80 : memref<1x32xf32, #tpu.memory_space<any>>) target(%81 : memref<1x32xf32, #tpu.memory_space<vmem>>) target_semaphore(%83 : memref<!tpu.dma_semaphore, #tpu.memory_space<semaphore_mem>>)
    %c4_62 = arith.constant 4 : index
    %84 = memref.load %arg1[%c4_62] : memref<8xi32, #tpu.memory_space<smem>>
    %c0_i32_63 = arith.constant 0 : i32
    %c49_i32_64 = arith.constant 49 : i32
    %85 = arith.maxsi %c0_i32_63, %84 : i32
    %86 = arith.minsi %c49_i32_64, %85 : i32
    %c12_i32 = arith.constant 12 : i32
    %c0_i32_65 = arith.constant 0 : i32
    %87 = tpu.memref_slice %arg4[%86, %c0_i32_65] : memref<50x32xf32, #tpu.memory_space<any>> -> memref<1x32xf32, #tpu.memory_space<any>>
    %c4_i32_66 = arith.constant 4 : i32
    %c0_i32_67 = arith.constant 0 : i32
    %88 = tpu.memref_slice %arg7[%c4_i32_66, %c0_i32_67] : memref<8x32xf32, #tpu.memory_space<vmem>> -> memref<1x32xf32, #tpu.memory_space<vmem>>
    %89 = tpu.memref_slice %arg8[%c12_i32] : memref<16x!tpu.dma_semaphore, #tpu.memory_space<semaphore_mem>> -> memref<1x!tpu.dma_semaphore, #tpu.memory_space<semaphore_mem>>
    %90 = tpu.memref_squeeze %89 : memref<1x!tpu.dma_semaphore, #tpu.memory_space<semaphore_mem>> -> memref<!tpu.dma_semaphore, #tpu.memory_space<semaphore_mem>>
    tpu.enqueue_dma source(%87 : memref<1x32xf32, #tpu.memory_space<any>>) target(%88 : memref<1x32xf32, #tpu.memory_space<vmem>>) target_semaphore(%90 : memref<!tpu.dma_semaphore, #tpu.memory_space<semaphore_mem>>)
    %c5_68 = arith.constant 5 : index
    %91 = memref.load %arg1[%c5_68] : memref<8xi32, #tpu.memory_space<smem>>
    %c0_i32_69 = arith.constant 0 : i32
    %c49_i32_70 = arith.constant 49 : i32
    %92 = arith.maxsi %c0_i32_69, %91 : i32
    %93 = arith.minsi %c49_i32_70, %92 : i32
    %c13_i32 = arith.constant 13 : i32
    %c0_i32_71 = arith.constant 0 : i32
    %94 = tpu.memref_slice %arg4[%93, %c0_i32_71] : memref<50x32xf32, #tpu.memory_space<any>> -> memref<1x32xf32, #tpu.memory_space<any>>
    %c5_i32_72 = arith.constant 5 : i32
    %c0_i32_73 = arith.constant 0 : i32
    %95 = tpu.memref_slice %arg7[%c5_i32_72, %c0_i32_73] : memref<8x32xf32, #tpu.memory_space<vmem>> -> memref<1x32xf32, #tpu.memory_space<vmem>>
    %96 = tpu.memref_slice %arg8[%c13_i32] : memref<16x!tpu.dma_semaphore, #tpu.memory_space<semaphore_mem>> -> memref<1x!tpu.dma_semaphore, #tpu.memory_space<semaphore_mem>>
    %97 = tpu.memref_squeeze %96 : memref<1x!tpu.dma_semaphore, #tpu.memory_space<semaphore_mem>> -> memref<!tpu.dma_semaphore, #tpu.memory_space<semaphore_mem>>
    tpu.enqueue_dma source(%94 : memref<1x32xf32, #tpu.memory_space<any>>) target(%95 : memref<1x32xf32, #tpu.memory_space<vmem>>) target_semaphore(%97 : memref<!tpu.dma_semaphore, #tpu.memory_space<semaphore_mem>>)
    %c6_74 = arith.constant 6 : index
    %98 = memref.load %arg1[%c6_74] : memref<8xi32, #tpu.memory_space<smem>>
    %c0_i32_75 = arith.constant 0 : i32
    %c49_i32_76 = arith.constant 49 : i32
    %99 = arith.maxsi %c0_i32_75, %98 : i32
    %100 = arith.minsi %c49_i32_76, %99 : i32
    %c14_i32 = arith.constant 14 : i32
    %c0_i32_77 = arith.constant 0 : i32
    %101 = tpu.memref_slice %arg4[%100, %c0_i32_77] : memref<50x32xf32, #tpu.memory_space<any>> -> memref<1x32xf32, #tpu.memory_space<any>>
    %c6_i32_78 = arith.constant 6 : i32
    %c0_i32_79 = arith.constant 0 : i32
    %102 = tpu.memref_slice %arg7[%c6_i32_78, %c0_i32_79] : memref<8x32xf32, #tpu.memory_space<vmem>> -> memref<1x32xf32, #tpu.memory_space<vmem>>
    %103 = tpu.memref_slice %arg8[%c14_i32] : memref<16x!tpu.dma_semaphore, #tpu.memory_space<semaphore_mem>> -> memref<1x!tpu.dma_semaphore, #tpu.memory_space<semaphore_mem>>
    %104 = tpu.memref_squeeze %103 : memref<1x!tpu.dma_semaphore, #tpu.memory_space<semaphore_mem>> -> memref<!tpu.dma_semaphore, #tpu.memory_space<semaphore_mem>>
    tpu.enqueue_dma source(%101 : memref<1x32xf32, #tpu.memory_space<any>>) target(%102 : memref<1x32xf32, #tpu.memory_space<vmem>>) target_semaphore(%104 : memref<!tpu.dma_semaphore, #tpu.memory_space<semaphore_mem>>)
    %c7_80 = arith.constant 7 : index
    %105 = memref.load %arg1[%c7_80] : memref<8xi32, #tpu.memory_space<smem>>
    %c0_i32_81 = arith.constant 0 : i32
    %c49_i32_82 = arith.constant 49 : i32
    %106 = arith.maxsi %c0_i32_81, %105 : i32
    %107 = arith.minsi %c49_i32_82, %106 : i32
    %c15_i32 = arith.constant 15 : i32
    %c0_i32_83 = arith.constant 0 : i32
    %108 = tpu.memref_slice %arg4[%107, %c0_i32_83] : memref<50x32xf32, #tpu.memory_space<any>> -> memref<1x32xf32, #tpu.memory_space<any>>
    %c7_i32_84 = arith.constant 7 : i32
    %c0_i32_85 = arith.constant 0 : i32
    %109 = tpu.memref_slice %arg7[%c7_i32_84, %c0_i32_85] : memref<8x32xf32, #tpu.memory_space<vmem>> -> memref<1x32xf32, #tpu.memory_space<vmem>>
    %110 = tpu.memref_slice %arg8[%c15_i32] : memref<16x!tpu.dma_semaphore, #tpu.memory_space<semaphore_mem>> -> memref<1x!tpu.dma_semaphore, #tpu.memory_space<semaphore_mem>>
    %111 = tpu.memref_squeeze %110 : memref<1x!tpu.dma_semaphore, #tpu.memory_space<semaphore_mem>> -> memref<!tpu.dma_semaphore, #tpu.memory_space<semaphore_mem>>
    tpu.enqueue_dma source(%108 : memref<1x32xf32, #tpu.memory_space<any>>) target(%109 : memref<1x32xf32, #tpu.memory_space<vmem>>) target_semaphore(%111 : memref<!tpu.dma_semaphore, #tpu.memory_space<semaphore_mem>>)
    %c0_i32_86 = arith.constant 0 : i32
    %c0_i32_87 = arith.constant 0 : i32
    %112 = tpu.memref_slice %arg3[%2, %c0_i32_87] : memref<100x32xf32, #tpu.memory_space<any>> -> memref<1x32xf32, #tpu.memory_space<any>>
    %c0_i32_88 = arith.constant 0 : i32
    %c0_i32_89 = arith.constant 0 : i32
    %113 = tpu.memref_slice %arg6[%c0_i32_88, %c0_i32_89] : memref<8x32xf32, #tpu.memory_space<vmem>> -> memref<1x32xf32, #tpu.memory_space<vmem>>
    %114 = tpu.memref_slice %arg8[%c0_i32_86] : memref<16x!tpu.dma_semaphore, #tpu.memory_space<semaphore_mem>> -> memref<1x!tpu.dma_semaphore, #tpu.memory_space<semaphore_mem>>
    %115 = tpu.memref_squeeze %114 : memref<1x!tpu.dma_semaphore, #tpu.memory_space<semaphore_mem>> -> memref<!tpu.dma_semaphore, #tpu.memory_space<semaphore_mem>>
    tpu.wait_dma2 semaphore(%115 : memref<!tpu.dma_semaphore, #tpu.memory_space<semaphore_mem>>) src(%112 : memref<1x32xf32, #tpu.memory_space<any>>) dst(%113 : memref<1x32xf32, #tpu.memory_space<vmem>>)
    %c1_i32_90 = arith.constant 1 : i32
    %c0_i32_91 = arith.constant 0 : i32
    %116 = tpu.memref_slice %arg3[%9, %c0_i32_91] : memref<100x32xf32, #tpu.memory_space<any>> -> memref<1x32xf32, #tpu.memory_space<any>>
    %c1_i32_92 = arith.constant 1 : i32
    %c0_i32_93 = arith.constant 0 : i32
    %117 = tpu.memref_slice %arg6[%c1_i32_92, %c0_i32_93] : memref<8x32xf32, #tpu.memory_space<vmem>> -> memref<1x32xf32, #tpu.memory_space<vmem>>
    %118 = tpu.memref_slice %arg8[%c1_i32_90] : memref<16x!tpu.dma_semaphore, #tpu.memory_space<semaphore_mem>> -> memref<1x!tpu.dma_semaphore, #tpu.memory_space<semaphore_mem>>
    %119 = tpu.memref_squeeze %118 : memref<1x!tpu.dma_semaphore, #tpu.memory_space<semaphore_mem>> -> memref<!tpu.dma_semaphore, #tpu.memory_space<semaphore_mem>>
    tpu.wait_dma2 semaphore(%119 : memref<!tpu.dma_semaphore, #tpu.memory_space<semaphore_mem>>) src(%116 : memref<1x32xf32, #tpu.memory_space<any>>) dst(%117 : memref<1x32xf32, #tpu.memory_space<vmem>>)
    %c2_i32_94 = arith.constant 2 : i32
    %c0_i32_95 = arith.constant 0 : i32
    %120 = tpu.memref_slice %arg3[%16, %c0_i32_95] : memref<100x32xf32, #tpu.memory_space<any>> -> memref<1x32xf32, #tpu.memory_space<any>>
    %c2_i32_96 = arith.constant 2 : i32
    %c0_i32_97 = arith.constant 0 : i32
    %121 = tpu.memref_slice %arg6[%c2_i32_96, %c0_i32_97] : memref<8x32xf32, #tpu.memory_space<vmem>> -> memref<1x32xf32, #tpu.memory_space<vmem>>
    %122 = tpu.memref_slice %arg8[%c2_i32_94] : memref<16x!tpu.dma_semaphore, #tpu.memory_space<semaphore_mem>> -> memref<1x!tpu.dma_semaphore, #tpu.memory_space<semaphore_mem>>
    %123 = tpu.memref_squeeze %122 : memref<1x!tpu.dma_semaphore, #tpu.memory_space<semaphore_mem>> -> memref<!tpu.dma_semaphore, #tpu.memory_space<semaphore_mem>>
    tpu.wait_dma2 semaphore(%123 : memref<!tpu.dma_semaphore, #tpu.memory_space<semaphore_mem>>) src(%120 : memref<1x32xf32, #tpu.memory_space<any>>) dst(%121 : memref<1x32xf32, #tpu.memory_space<vmem>>)
    %c3_i32_98 = arith.constant 3 : i32
    %c0_i32_99 = arith.constant 0 : i32
    %124 = tpu.memref_slice %arg3[%23, %c0_i32_99] : memref<100x32xf32, #tpu.memory_space<any>> -> memref<1x32xf32, #tpu.memory_space<any>>
    %c3_i32_100 = arith.constant 3 : i32
    %c0_i32_101 = arith.constant 0 : i32
    %125 = tpu.memref_slice %arg6[%c3_i32_100, %c0_i32_101] : memref<8x32xf32, #tpu.memory_space<vmem>> -> memref<1x32xf32, #tpu.memory_space<vmem>>
    %126 = tpu.memref_slice %arg8[%c3_i32_98] : memref<16x!tpu.dma_semaphore, #tpu.memory_space<semaphore_mem>> -> memref<1x!tpu.dma_semaphore, #tpu.memory_space<semaphore_mem>>
    %127 = tpu.memref_squeeze %126 : memref<1x!tpu.dma_semaphore, #tpu.memory_space<semaphore_mem>> -> memref<!tpu.dma_semaphore, #tpu.memory_space<semaphore_mem>>
    tpu.wait_dma2 semaphore(%127 : memref<!tpu.dma_semaphore, #tpu.memory_space<semaphore_mem>>) src(%124 : memref<1x32xf32, #tpu.memory_space<any>>) dst(%125 : memref<1x32xf32, #tpu.memory_space<vmem>>)
    %c4_i32_102 = arith.constant 4 : i32
    %c0_i32_103 = arith.constant 0 : i32
    %128 = tpu.memref_slice %arg3[%30, %c0_i32_103] : memref<100x32xf32, #tpu.memory_space<any>> -> memref<1x32xf32, #tpu.memory_space<any>>
    %c4_i32_104 = arith.constant 4 : i32
    %c0_i32_105 = arith.constant 0 : i32
    %129 = tpu.memref_slice %arg6[%c4_i32_104, %c0_i32_105] : memref<8x32xf32, #tpu.memory_space<vmem>> -> memref<1x32xf32, #tpu.memory_space<vmem>>
    %130 = tpu.memref_slice %arg8[%c4_i32_102] : memref<16x!tpu.dma_semaphore, #tpu.memory_space<semaphore_mem>> -> memref<1x!tpu.dma_semaphore, #tpu.memory_space<semaphore_mem>>
    %131 = tpu.memref_squeeze %130 : memref<1x!tpu.dma_semaphore, #tpu.memory_space<semaphore_mem>> -> memref<!tpu.dma_semaphore, #tpu.memory_space<semaphore_mem>>
    tpu.wait_dma2 semaphore(%131 : memref<!tpu.dma_semaphore, #tpu.memory_space<semaphore_mem>>) src(%128 : memref<1x32xf32, #tpu.memory_space<any>>) dst(%129 : memref<1x32xf32, #tpu.memory_space<vmem>>)
    %c5_i32_106 = arith.constant 5 : i32
    %c0_i32_107 = arith.constant 0 : i32
    %132 = tpu.memref_slice %arg3[%37, %c0_i32_107] : memref<100x32xf32, #tpu.memory_space<any>> -> memref<1x32xf32, #tpu.memory_space<any>>
    %c5_i32_108 = arith.constant 5 : i32
    %c0_i32_109 = arith.constant 0 : i32
    %133 = tpu.memref_slice %arg6[%c5_i32_108, %c0_i32_109] : memref<8x32xf32, #tpu.memory_space<vmem>> -> memref<1x32xf32, #tpu.memory_space<vmem>>
    %134 = tpu.memref_slice %arg8[%c5_i32_106] : memref<16x!tpu.dma_semaphore, #tpu.memory_space<semaphore_mem>> -> memref<1x!tpu.dma_semaphore, #tpu.memory_space<semaphore_mem>>
    %135 = tpu.memref_squeeze %134 : memref<1x!tpu.dma_semaphore, #tpu.memory_space<semaphore_mem>> -> memref<!tpu.dma_semaphore, #tpu.memory_space<semaphore_mem>>
    tpu.wait_dma2 semaphore(%135 : memref<!tpu.dma_semaphore, #tpu.memory_space<semaphore_mem>>) src(%132 : memref<1x32xf32, #tpu.memory_space<any>>) dst(%133 : memref<1x32xf32, #tpu.memory_space<vmem>>)
    %c6_i32_110 = arith.constant 6 : i32
    %c0_i32_111 = arith.constant 0 : i32
    %136 = tpu.memref_slice %arg3[%44, %c0_i32_111] : memref<100x32xf32, #tpu.memory_space<any>> -> memref<1x32xf32, #tpu.memory_space<any>>
    %c6_i32_112 = arith.constant 6 : i32
    %c0_i32_113 = arith.constant 0 : i32
    %137 = tpu.memref_slice %arg6[%c6_i32_112, %c0_i32_113] : memref<8x32xf32, #tpu.memory_space<vmem>> -> memref<1x32xf32, #tpu.memory_space<vmem>>
    %138 = tpu.memref_slice %arg8[%c6_i32_110] : memref<16x!tpu.dma_semaphore, #tpu.memory_space<semaphore_mem>> -> memref<1x!tpu.dma_semaphore, #tpu.memory_space<semaphore_mem>>
    %139 = tpu.memref_squeeze %138 : memref<1x!tpu.dma_semaphore, #tpu.memory_space<semaphore_mem>> -> memref<!tpu.dma_semaphore, #tpu.memory_space<semaphore_mem>>
    tpu.wait_dma2 semaphore(%139 : memref<!tpu.dma_semaphore, #tpu.memory_space<semaphore_mem>>) src(%136 : memref<1x32xf32, #tpu.memory_space<any>>) dst(%137 : memref<1x32xf32, #tpu.memory_space<vmem>>)
    %c7_i32_114 = arith.constant 7 : i32
    %c0_i32_115 = arith.constant 0 : i32
    %140 = tpu.memref_slice %arg3[%51, %c0_i32_115] : memref<100x32xf32, #tpu.memory_space<any>> -> memref<1x32xf32, #tpu.memory_space<any>>
    %c7_i32_116 = arith.constant 7 : i32
    %c0_i32_117 = arith.constant 0 : i32
    %141 = tpu.memref_slice %arg6[%c7_i32_116, %c0_i32_117] : memref<8x32xf32, #tpu.memory_space<vmem>> -> memref<1x32xf32, #tpu.memory_space<vmem>>
    %142 = tpu.memref_slice %arg8[%c7_i32_114] : memref<16x!tpu.dma_semaphore, #tpu.memory_space<semaphore_mem>> -> memref<1x!tpu.dma_semaphore, #tpu.memory_space<semaphore_mem>>
    %143 = tpu.memref_squeeze %142 : memref<1x!tpu.dma_semaphore, #tpu.memory_space<semaphore_mem>> -> memref<!tpu.dma_semaphore, #tpu.memory_space<semaphore_mem>>
    tpu.wait_dma2 semaphore(%143 : memref<!tpu.dma_semaphore, #tpu.memory_space<semaphore_mem>>) src(%140 : memref<1x32xf32, #tpu.memory_space<any>>) dst(%141 : memref<1x32xf32, #tpu.memory_space<vmem>>)
    %c8_i32_118 = arith.constant 8 : i32
    %c0_i32_119 = arith.constant 0 : i32
    %144 = tpu.memref_slice %arg4[%58, %c0_i32_119] : memref<50x32xf32, #tpu.memory_space<any>> -> memref<1x32xf32, #tpu.memory_space<any>>
    %c0_i32_120 = arith.constant 0 : i32
    %c0_i32_121 = arith.constant 0 : i32
    %145 = tpu.memref_slice %arg7[%c0_i32_120, %c0_i32_121] : memref<8x32xf32, #tpu.memory_space<vmem>> -> memref<1x32xf32, #tpu.memory_space<vmem>>
    %146 = tpu.memref_slice %arg8[%c8_i32_118] : memref<16x!tpu.dma_semaphore, #tpu.memory_space<semaphore_mem>> -> memref<1x!tpu.dma_semaphore, #tpu.memory_space<semaphore_mem>>
    %147 = tpu.memref_squeeze %146 : memref<1x!tpu.dma_semaphore, #tpu.memory_space<semaphore_mem>> -> memref<!tpu.dma_semaphore, #tpu.memory_space<semaphore_mem>>
    tpu.wait_dma2 semaphore(%147 : memref<!tpu.dma_semaphore, #tpu.memory_space<semaphore_mem>>) src(%144 : memref<1x32xf32, #tpu.memory_space<any>>) dst(%145 : memref<1x32xf32, #tpu.memory_space<vmem>>)
    %c9_i32_122 = arith.constant 9 : i32
    %c0_i32_123 = arith.constant 0 : i32
    %148 = tpu.memref_slice %arg4[%65, %c0_i32_123] : memref<50x32xf32, #tpu.memory_space<any>> -> memref<1x32xf32, #tpu.memory_space<any>>
    %c1_i32_124 = arith.constant 1 : i32
    %c0_i32_125 = arith.constant 0 : i32
    %149 = tpu.memref_slice %arg7[%c1_i32_124, %c0_i32_125] : memref<8x32xf32, #tpu.memory_space<vmem>> -> memref<1x32xf32, #tpu.memory_space<vmem>>
    %150 = tpu.memref_slice %arg8[%c9_i32_122] : memref<16x!tpu.dma_semaphore, #tpu.memory_space<semaphore_mem>> -> memref<1x!tpu.dma_semaphore, #tpu.memory_space<semaphore_mem>>
    %151 = tpu.memref_squeeze %150 : memref<1x!tpu.dma_semaphore, #tpu.memory_space<semaphore_mem>> -> memref<!tpu.dma_semaphore, #tpu.memory_space<semaphore_mem>>
    tpu.wait_dma2 semaphore(%151 : memref<!tpu.dma_semaphore, #tpu.memory_space<semaphore_mem>>) src(%148 : memref<1x32xf32, #tpu.memory_space<any>>) dst(%149 : memref<1x32xf32, #tpu.memory_space<vmem>>)
    %c10_i32_126 = arith.constant 10 : i32
    %c0_i32_127 = arith.constant 0 : i32
    %152 = tpu.memref_slice %arg4[%72, %c0_i32_127] : memref<50x32xf32, #tpu.memory_space<any>> -> memref<1x32xf32, #tpu.memory_space<any>>
    %c2_i32_128 = arith.constant 2 : i32
    %c0_i32_129 = arith.constant 0 : i32
    %153 = tpu.memref_slice %arg7[%c2_i32_128, %c0_i32_129] : memref<8x32xf32, #tpu.memory_space<vmem>> -> memref<1x32xf32, #tpu.memory_space<vmem>>
    %154 = tpu.memref_slice %arg8[%c10_i32_126] : memref<16x!tpu.dma_semaphore, #tpu.memory_space<semaphore_mem>> -> memref<1x!tpu.dma_semaphore, #tpu.memory_space<semaphore_mem>>
    %155 = tpu.memref_squeeze %154 : memref<1x!tpu.dma_semaphore, #tpu.memory_space<semaphore_mem>> -> memref<!tpu.dma_semaphore, #tpu.memory_space<semaphore_mem>>
    tpu.wait_dma2 semaphore(%155 : memref<!tpu.dma_semaphore, #tpu.memory_space<semaphore_mem>>) src(%152 : memref<1x32xf32, #tpu.memory_space<any>>) dst(%153 : memref<1x32xf32, #tpu.memory_space<vmem>>)
    %c11_i32_130 = arith.constant 11 : i32
    %c0_i32_131 = arith.constant 0 : i32
    %156 = tpu.memref_slice %arg4[%79, %c0_i32_131] : memref<50x32xf32, #tpu.memory_space<any>> -> memref<1x32xf32, #tpu.memory_space<any>>
    %c3_i32_132 = arith.constant 3 : i32
    %c0_i32_133 = arith.constant 0 : i32
    %157 = tpu.memref_slice %arg7[%c3_i32_132, %c0_i32_133] : memref<8x32xf32, #tpu.memory_space<vmem>> -> memref<1x32xf32, #tpu.memory_space<vmem>>
    %158 = tpu.memref_slice %arg8[%c11_i32_130] : memref<16x!tpu.dma_semaphore, #tpu.memory_space<semaphore_mem>> -> memref<1x!tpu.dma_semaphore, #tpu.memory_space<semaphore_mem>>
    %159 = tpu.memref_squeeze %158 : memref<1x!tpu.dma_semaphore, #tpu.memory_space<semaphore_mem>> -> memref<!tpu.dma_semaphore, #tpu.memory_space<semaphore_mem>>
    tpu.wait_dma2 semaphore(%159 : memref<!tpu.dma_semaphore, #tpu.memory_space<semaphore_mem>>) src(%156 : memref<1x32xf32, #tpu.memory_space<any>>) dst(%157 : memref<1x32xf32, #tpu.memory_space<vmem>>)
    %c12_i32_134 = arith.constant 12 : i32
    %c0_i32_135 = arith.constant 0 : i32
    %160 = tpu.memref_slice %arg4[%86, %c0_i32_135] : memref<50x32xf32, #tpu.memory_space<any>> -> memref<1x32xf32, #tpu.memory_space<any>>
    %c4_i32_136 = arith.constant 4 : i32
    %c0_i32_137 = arith.constant 0 : i32
    %161 = tpu.memref_slice %arg7[%c4_i32_136, %c0_i32_137] : memref<8x32xf32, #tpu.memory_space<vmem>> -> memref<1x32xf32, #tpu.memory_space<vmem>>
    %162 = tpu.memref_slice %arg8[%c12_i32_134] : memref<16x!tpu.dma_semaphore, #tpu.memory_space<semaphore_mem>> -> memref<1x!tpu.dma_semaphore, #tpu.memory_space<semaphore_mem>>
    %163 = tpu.memref_squeeze %162 : memref<1x!tpu.dma_semaphore, #tpu.memory_space<semaphore_mem>> -> memref<!tpu.dma_semaphore, #tpu.memory_space<semaphore_mem>>
    tpu.wait_dma2 semaphore(%163 : memref<!tpu.dma_semaphore, #tpu.memory_space<semaphore_mem>>) src(%160 : memref<1x32xf32, #tpu.memory_space<any>>) dst(%161 : memref<1x32xf32, #tpu.memory_space<vmem>>)
    %c13_i32_138 = arith.constant 13 : i32
    %c0_i32_139 = arith.constant 0 : i32
    %164 = tpu.memref_slice %arg4[%93, %c0_i32_139] : memref<50x32xf32, #tpu.memory_space<any>> -> memref<1x32xf32, #tpu.memory_space<any>>
    %c5_i32_140 = arith.constant 5 : i32
    %c0_i32_141 = arith.constant 0 : i32
    %165 = tpu.memref_slice %arg7[%c5_i32_140, %c0_i32_141] : memref<8x32xf32, #tpu.memory_space<vmem>> -> memref<1x32xf32, #tpu.memory_space<vmem>>
    %166 = tpu.memref_slice %arg8[%c13_i32_138] : memref<16x!tpu.dma_semaphore, #tpu.memory_space<semaphore_mem>> -> memref<1x!tpu.dma_semaphore, #tpu.memory_space<semaphore_mem>>
    %167 = tpu.memref_squeeze %166 : memref<1x!tpu.dma_semaphore, #tpu.memory_space<semaphore_mem>> -> memref<!tpu.dma_semaphore, #tpu.memory_space<semaphore_mem>>
    tpu.wait_dma2 semaphore(%167 : memref<!tpu.dma_semaphore, #tpu.memory_space<semaphore_mem>>) src(%164 : memref<1x32xf32, #tpu.memory_space<any>>) dst(%165 : memref<1x32xf32, #tpu.memory_space<vmem>>)
    %c14_i32_142 = arith.constant 14 : i32
    %c0_i32_143 = arith.constant 0 : i32
    %168 = tpu.memref_slice %arg4[%100, %c0_i32_143] : memref<50x32xf32, #tpu.memory_space<any>> -> memref<1x32xf32, #tpu.memory_space<any>>
    %c6_i32_144 = arith.constant 6 : i32
    %c0_i32_145 = arith.constant 0 : i32
    %169 = tpu.memref_slice %arg7[%c6_i32_144, %c0_i32_145] : memref<8x32xf32, #tpu.memory_space<vmem>> -> memref<1x32xf32, #tpu.memory_space<vmem>>
    %170 = tpu.memref_slice %arg8[%c14_i32_142] : memref<16x!tpu.dma_semaphore, #tpu.memory_space<semaphore_mem>> -> memref<1x!tpu.dma_semaphore, #tpu.memory_space<semaphore_mem>>
    %171 = tpu.memref_squeeze %170 : memref<1x!tpu.dma_semaphore, #tpu.memory_space<semaphore_mem>> -> memref<!tpu.dma_semaphore, #tpu.memory_space<semaphore_mem>>
    tpu.wait_dma2 semaphore(%171 : memref<!tpu.dma_semaphore, #tpu.memory_space<semaphore_mem>>) src(%168 : memref<1x32xf32, #tpu.memory_space<any>>) dst(%169 : memref<1x32xf32, #tpu.memory_space<vmem>>)
    %c15_i32_146 = arith.constant 15 : i32
    %c0_i32_147 = arith.constant 0 : i32
    %172 = tpu.memref_slice %arg4[%107, %c0_i32_147] : memref<50x32xf32, #tpu.memory_space<any>> -> memref<1x32xf32, #tpu.memory_space<any>>
    %c7_i32_148 = arith.constant 7 : i32
    %c0_i32_149 = arith.constant 0 : i32
    %173 = tpu.memref_slice %arg7[%c7_i32_148, %c0_i32_149] : memref<8x32xf32, #tpu.memory_space<vmem>> -> memref<1x32xf32, #tpu.memory_space<vmem>>
    %174 = tpu.memref_slice %arg8[%c15_i32_146] : memref<16x!tpu.dma_semaphore, #tpu.memory_space<semaphore_mem>> -> memref<1x!tpu.dma_semaphore, #tpu.memory_space<semaphore_mem>>
    %175 = tpu.memref_squeeze %174 : memref<1x!tpu.dma_semaphore, #tpu.memory_space<semaphore_mem>> -> memref<!tpu.dma_semaphore, #tpu.memory_space<semaphore_mem>>
    tpu.wait_dma2 semaphore(%175 : memref<!tpu.dma_semaphore, #tpu.memory_space<semaphore_mem>>) src(%172 : memref<1x32xf32, #tpu.memory_space<any>>) dst(%173 : memref<1x32xf32, #tpu.memory_space<vmem>>)
    %c0_150 = arith.constant 0 : index
    %c0_151 = arith.constant 0 : index
    %176 = vector.load %arg6[%c0_150, %c0_151] : memref<8x32xf32, #tpu.memory_space<vmem>>, vector<8x32xf32>
    %cst = arith.constant dense<0.000000e+00> : vector<32xf32>
    %177 = vector.multi_reduction <add>, %176, %cst [0] : vector<8x32xf32> to vector<32xf32>
    %178 = vector.shape_cast %177 : vector<32xf32> to vector<1x32xf32>
    %c0_152 = arith.constant 0 : index
    %c0_153 = arith.constant 0 : index
    %179 = vector.load %arg7[%c0_152, %c0_153] : memref<8x32xf32, #tpu.memory_space<vmem>>, vector<8x32xf32>
    %180 = vector.broadcast %178 : vector<1x32xf32> to vector<8x32xf32>
    %181 = arith.mulf %180, %179 : vector<8x32xf32>
    %cst_154 = arith.constant dense<0.000000e+00> : vector<8xf32>
    %182 = vector.multi_reduction <add>, %181, %cst_154 [1] : vector<8x32xf32> to vector<8xf32>
    %183 = vector.shape_cast %182 : vector<8xf32> to vector<8x1xf32>
    %c0_155 = arith.constant 0 : index
    %c0_156 = arith.constant 0 : index
    %184 = vector.load %arg2[%c0_155, %c0_156] : memref<8x1xf32, #tpu.memory_space<vmem>>, vector<8x1xf32>
    %cst_157 = arith.constant 2.000000e+00 : f32
    %185 = vector.broadcast %cst_157 : f32 to vector<8x1xf32>
    %186 = arith.mulf %185, %184 : vector<8x1xf32>
    %cst_158 = arith.constant 1.000000e+00 : f32
    %187 = vector.broadcast %cst_158 : f32 to vector<8x1xf32>
    %188 = arith.subf %187, %186 : vector<8x1xf32>
    %189 = arith.mulf %188, %183 : vector<8x1xf32>
    %cst_159 = arith.constant 0.000000e+00 : f32
    %190 = vector.broadcast %cst_159 : f32 to vector<8x1xf32>
    %191 = arith.maximumf %189, %190 : vector<8x1xf32>
    %192 = math.absf %189 : vector<8x1xf32>
    %cst_160 = arith.constant 0.000000e+00 : f32
    %193 = vector.broadcast %cst_160 : f32 to vector<8x1xf32>
    %194 = arith.subf %193, %192 : vector<8x1xf32>
    %195 = math.exp %194 : vector<8x1xf32>
    %196 = math.log1p %195 : vector<8x1xf32>
    %197 = arith.addf %191, %196 : vector<8x1xf32>
    %cst_161 = arith.constant 0.000000e+00 : f32
    %198 = vector.broadcast %cst_161 : f32 to vector<8x1xf32>
    %199 = arith.subf %198, %197 : vector<8x1xf32>
    %cst_162 = arith.constant dense<0.000000e+00> : vector<1xf32>
    %200 = vector.multi_reduction <add>, %199, %cst_162 [0] : vector<8x1xf32> to vector<1xf32>
    %201 = vector.shape_cast %200 : vector<1xf32> to vector<1x1xf32>
    %c0_163 = arith.constant 0 : index
    %c0_164 = arith.constant 0 : index
    %202 = vector.load %arg5[%c0_163, %c0_164] : memref<1x1xf32, #tpu.memory_space<vmem>>, vector<1x1xf32>
    tpu.vector_store %arg5[%c0_163, %c0_164], %201 {strides = array<i32>} : memref<1x1xf32, #tpu.memory_space<vmem>>, vector<1x1xf32>,
    return
  }
}

</mosaic_0001>

<llo_original>
// kernel: tpu_custom_call.1
$region0: #{tpu_custom_call.1}
  #allocation0 [shape = 'u32[]', space=smem, size = 0x4, offset = 0x4, fixed_abs, tag = 'smem constant byte address 0x4 - core index']
  #allocation1 [shape = 'u32[144,128]{1,0:T(1,128)}', space=vmem, size = 0x12000, scoped, tag = 'internal scratch']
  #allocation2 [shape = 'f32[8,32]{1,0:T(8,128)}', space=vmem, size = 0x1000, scoped, tag = 'scratch operand']
  #allocation3 [shape = 'f32[8,32]{1,0:T(8,128)}', space=vmem, size = 0x1000, scoped, tag = 'scratch operand']
  #allocation4 [shape = 's32[16]{0}', space=sflag, size = 0x40, scoped, tag = 'scratch operand']
  #allocation11 [shape = 's32[]', space=sflag, size = 0x4, offset = 0, fixed_abs, tag = 'sflag constant byte address 0x0 - dummy sync flag']
  #allocation12 [shape = 's32[]', space=sflag, size = 0x4, offset = 0, fixed_abs, tag = 'sflag constant byte address 0x0 - dummy sync flag']
  #allocation13 [shape = 's32[]', space=sflag, size = 0x4, offset = 0, fixed_abs, tag = 'sflag constant byte address 0x0 - dummy sync flag']
  #allocation14 [shape = 's32[]', space=sflag, size = 0x4, offset = 0, fixed_abs, tag = 'sflag constant byte address 0x0 - dummy sync flag']
  #allocation15 [shape = 's32[]', space=sflag, size = 0x4, offset = 0, fixed_abs, tag = 'sflag constant byte address 0x0 - dummy sync flag']
  #allocation16 [shape = 's32[]', space=sflag, size = 0x4, offset = 0, fixed_abs, tag = 'sflag constant byte address 0x0 - dummy sync flag']
  #allocation17 [shape = 's32[]', space=sflag, size = 0x4, offset = 0, fixed_abs, tag = 'sflag constant byte address 0x0 - dummy sync flag']
  #allocation18 [shape = 's32[]', space=sflag, size = 0x4, offset = 0, fixed_abs, tag = 'sflag constant byte address 0x0 - dummy sync flag']
  #allocation19 [shape = 's32[]', space=sflag, size = 0x4, offset = 0, fixed_abs, tag = 'sflag constant byte address 0x0 - dummy sync flag']
  #allocation20 [shape = 's32[]', space=sflag, size = 0x4, offset = 0, fixed_abs, tag = 'sflag constant byte address 0x0 - dummy sync flag']
  #allocation21 [shape = 's32[]', space=sflag, size = 0x4, offset = 0, fixed_abs, tag = 'sflag constant byte address 0x0 - dummy sync flag']
  #allocation22 [shape = 's32[]', space=sflag, size = 0x4, offset = 0, fixed_abs, tag = 'sflag constant byte address 0x0 - dummy sync flag']
  #allocation23 [shape = 's32[]', space=sflag, size = 0x4, offset = 0, fixed_abs, tag = 'sflag constant byte address 0x0 - dummy sync flag']
  #allocation24 [shape = 's32[]', space=sflag, size = 0x4, offset = 0, fixed_abs, tag = 'sflag constant byte address 0x0 - dummy sync flag']
  #allocation25 [shape = 's32[]', space=sflag, size = 0x4, offset = 0, fixed_abs, tag = 'sflag constant byte address 0x0 - dummy sync flag']
  #allocation26 [shape = 's32[]', space=sflag, size = 0x4, offset = 0, fixed_abs, tag = 'sflag constant byte address 0x0 - dummy sync flag']
  %s0 = inlined_call_operand.vmem [shape: s32[8], index: 0, kind: input, shape index: {}]
  %s1 = inlined_call_operand.vmem [shape: s32[8], index: 1, kind: input, shape index: {}]
  %s2 = inlined_call_operand.vmem [shape: f32[8,1], index: 2, kind: input, shape index: {}]
  %s3 = inlined_call_operand.vmem [shape: f32[100,32], index: 3, kind: input, shape index: {}]
  %s4 = inlined_call_operand.vmem [shape: f32[50,32], index: 4, kind: input, shape index: {}]
  %s5 = inlined_call_operand.hbm [shape: f32[1,1], index: 5, kind: output, shape index: {}]
  %s6 = sld [smem:[#allocation0]]
  $region510: #{tpu_custom_call.1} parent=0
    _
  %s8 = ssub.s32 1, %s6
  %s9 = scalar_select 0, %s8, %s6
  $region1: #{tpu_custom_call.1} parent=0
    #allocation5 [shape = 'u8[512]{0}', space=smem, size = 0x200, scoped, tag = 'input window, operand 0, single buffered']
    #allocation6 [shape = 's32[1]{0}', space=sflag, size = 0x4, scoped, tag = 'scoped memory for tpu_custom_call.1']
    #allocation7 [shape = 's32[1]{0}', space=sflag, size = 0x4, scoped, tag = 'scoped memory for tpu_custom_call.1']
    #allocation8 [shape = 'u8[512]{0}', space=smem, size = 0x200, scoped, tag = 'input window, operand 1, single buffered']
    #allocation9 [shape = 's32[1]{0}', space=sflag, size = 0x4, scoped, tag = 'scoped memory for tpu_custom_call.1']
    #allocation10 [shape = 'u8[512]{0}', space=vmem, size = 0x400, scoped, tag = 'output window, operand 0, single buffered']
    %10 = vsyncpa [#allocation7], 0
    %11 = vsyncpa [#allocation9], 0
    %12 = vsyncpa [#allocation6], 0
    // Predicated region
    $region2: #{tpu_custom_call.1} parent=1 // pred_check
      _
    $region3: #{tpu_custom_call.1} parent=1 // pred_check_branch
      %14 = sbr.rel (0) target = $region5
    $region4: #{tpu_custom_call.1} parent=1 // pred_region
      %s16 = ssub.s32 16, 16
      %17 = vsyncadd [#allocation7], %s16
      %s19 = sshll.u32 %s0, 4
      %s20 = int_to_ptr.vmem [resolvable:$true] %s19
      %22 = dma.vmem_to_smem %s20, 16, [#allocation5], [#allocation7]
    $region5: #{tpu_custom_call.1} parent=1 // pred_fallthru
      _
    // Predicated region
    $region6: #{tpu_custom_call.1} parent=1 // pred_check
      _
    $region7: #{tpu_custom_call.1} parent=1 // pred_check_branch
      %24 = sbr.rel (0) target = $region9
    $region8: #{tpu_custom_call.1} parent=1 // pred_region
      %s26 = ssub.s32 16, 16
      %27 = vsyncadd [#allocation9], %s26
      %s29 = sshll.u32 %s1, 4
      %s30 = int_to_ptr.vmem [resolvable:$true] %s29
      %32 = dma.vmem_to_smem %s30, 16, [#allocation8], [#allocation9]
    $region9: #{tpu_custom_call.1} parent=1 // pred_fallthru
      _
    // Predicated region
    $region10: #{tpu_custom_call.1} parent=1 // pred_check
      _
    $region11: #{tpu_custom_call.1} parent=1 // pred_check_branch
      %34 = sbr.rel (0) target = $region13
    $region12: #{tpu_custom_call.1} parent=1 // pred_region
      _
    $region13: #{tpu_custom_call.1} parent=1 // pred_fallthru
      _
    // Predicated region
    $region14: #{tpu_custom_call.1} parent=1 // pred_check
      _
    $region15: #{tpu_custom_call.1} parent=1 // pred_check_branch
      %36 = sbr.rel (0) target = $region17
    $region16: #{tpu_custom_call.1} parent=1 // pred_region
      %37 = dma.done [#allocation7], 16
    $region17: #{tpu_custom_call.1} parent=1 // pred_fallthru
      _
    // Predicated region
    $region18: #{tpu_custom_call.1} parent=1 // pred_check
      _
    $region19: #{tpu_custom_call.1} parent=1 // pred_check_branch
      %39 = sbr.rel (0) target = $region21
    $region20: #{tpu_custom_call.1} parent=1 // pred_region
      %40 = dma.done [#allocation9], 16
    $region21: #{tpu_custom_call.1} parent=1 // pred_fallthru
      _
    %41 = sfence
    %s42 = sld [smem:[#allocation5]]
    %p43 = scmp.gt.s32.totalorder %s42, 0
    %s44 = scalar_select %p43, %s42, 0
    %p45 = scmp.lt.s32.totalorder %s44, 99
    %s46 = scalar_select %p45, %s44, 99
    %s47 = scalar_lea.vmem %s3, %s46
    %p49 = scmp.lt.u32.totalorder 1, 8
    %p50 = pneg %p49
    // Predicated region
    $region22: #{tpu_custom_call.1} parent=1 // pred_check
      _
    $region23: #{tpu_custom_call.1} parent=1 // pred_check_branch
      %52 = sbr.rel (%p49) target = $region25
    $region24: #{tpu_custom_call.1} parent=1 // pred_region
      %s67 = sand.u32 1, 7
      %p68 = scmp.eq.s32.totalorder %s67, 0
      %p69 = pneg %p68
      // Predicated region
      $region37: #{tpu_custom_call.1} parent=24 // pred_check
        _
      $region38: #{tpu_custom_call.1} parent=24 // pred_check_branch
        %71 = sbr.rel (%p68) target = $region40
      $region39: #{tpu_custom_call.1} parent=24 // pred_region
        %s72 = sand.u32 1, 7
        %s73 = ssub.s32 1, %s72
        %s74 = scalar_lea.vmem %s47, %s73
        %s75 = ssub.s32 1, %s72
        %s76 = scalar_lea.vmem [#allocation2], %s75
        %s77 = sshllo.u32 0, %s72
        loop: start=0, step=1, limit=1
        $region41: #{tpu_custom_call.1} parent=39 // loop_pre_header
          _
        $region42: #{tpu_custom_call.1} parent=39 // loop_header
          %s79 = sphi 0, %s83
          %p80 = scmp.ge.s32.totalorder %s79, 1
          %s84 = sphi %s74, %s74
          %s85 = sphi %s76, %s76
        $region43: #{tpu_custom_call.1} parent=39 // loop_header_branch
          %82 = sbr.rel (%p80) target = $region47
        $region44: #{tpu_custom_call.1} parent=39 // loop_body
          %v86 = vld [vmem:[%s84] sm:%s77]
          %87 = vst [vmem:[%s85] sm:%s77] %v86
        $region45: #{tpu_custom_call.1} parent=39 // loop_footer
          %s83 = sadd.s32 1, %s79
        $region46: #{tpu_custom_call.1} parent=39 // loop_footer_branch
          %78 = sbr.rel target = $region42
        $region47: #{tpu_custom_call.1} parent=39 // loop_exit
          _
      $region40: #{tpu_custom_call.1} parent=24 // pred_fallthru
        _
    $region25: #{tpu_custom_call.1} parent=1 // pred_fallthru
      _
    // Predicated region
    $region26: #{tpu_custom_call.1} parent=1 // pred_check
      %p53 = pneg %p49
    $region27: #{tpu_custom_call.1} parent=1 // pred_check_branch
      %55 = sbr.rel (%p53) target = $region29
    $region28: #{tpu_custom_call.1} parent=1 // pred_region
      %s56 = sshllo.u32 0, 1
      loop: start=0, step=1, limit=1
      $region30: #{tpu_custom_call.1} parent=28 // loop_pre_header
        _
      $region31: #{tpu_custom_call.1} parent=28 // loop_header
        %s58 = sphi 0, %s62
        %p59 = scmp.ge.s32.totalorder %s58, 1
        %s63 = sphi %s47, %s47
        %s64 = sphi [#allocation2], [#allocation2]
      $region32: #{tpu_custom_call.1} parent=28 // loop_header_branch
        %61 = sbr.rel (%p59) target = $region36
      $region33: #{tpu_custom_call.1} parent=28 // loop_body
        %v65 = vld [vmem:[%s63] sm:%s56]
        %66 = vst [vmem:[%s64] sm:%s56] %v65
      $region34: #{tpu_custom_call.1} parent=28 // loop_footer
        %s62 = sadd.s32 1, %s58
      $region35: #{tpu_custom_call.1} parent=28 // loop_footer_branch
        %57 = sbr.rel target = $region31
      $region36: #{tpu_custom_call.1} parent=28 // loop_exit
        _
    $region29: #{tpu_custom_call.1} parent=1 // pred_fallthru
      _
    // Predicated region
    $region48: #{tpu_custom_call.1} parent=1 // pred_check
      _
    $region49: #{tpu_custom_call.1} parent=1 // pred_check_branch
      %90 = sbr.rel (0) target = $region51
    $region50: #{tpu_custom_call.1} parent=1 // pred_region
      %91 = vsyncadd [#allocation4], 16
    $region51: #{tpu_custom_call.1} parent=1 // pred_fallthru
      _
    %s92 = sld [smem:[#allocation5 + $0x1]]
    %p93 = scmp.gt.s32.totalorder %s92, 0
    %s94 = scalar_select %p93, %s92, 0
    %p95 = scmp.lt.s32.totalorder %s94, 99
    %s96 = scalar_select %p95, %s94, 99
    %s97 = scalar_lea.vmem %s3, %s96
    %s98 = scalar_lea.vmem [#allocation2], 1
    %s99 = scalar_lea.sflag [#allocation4], 1
    %p101 = scmp.lt.u32.totalorder 1, 8
    %p102 = pneg %p101
    // Predicated region
    $region52: #{tpu_custom_call.1} parent=1 // pred_check
      _
    $region53: #{tpu_custom_call.1} parent=1 // pred_check_branch
      %104 = sbr.rel (%p101) target = $region55
    $region54: #{tpu_custom_call.1} parent=1 // pred_region
      %s119 = sand.u32 1, 7
      %p120 = scmp.eq.s32.totalorder %s119, 0
      %p121 = pneg %p120
      // Predicated region
      $region67: #{tpu_custom_call.1} parent=54 // pred_check
        _
      $region68: #{tpu_custom_call.1} parent=54 // pred_check_branch
        %123 = sbr.rel (%p120) target = $region70
      $region69: #{tpu_custom_call.1} parent=54 // pred_region
        %s124 = sand.u32 1, 7
        %s125 = ssub.s32 1, %s124
        %s126 = scalar_lea.vmem %s97, %s125
        %s127 = ssub.s32 1, %s124
        %s128 = scalar_lea.vmem %s98, %s127 [#allocation2]
        %s129 = sshllo.u32 0, %s124
        loop: start=0, step=1, limit=1
        $region71: #{tpu_custom_call.1} parent=69 // loop_pre_header
          _
        $region72: #{tpu_custom_call.1} parent=69 // loop_header
          %s131 = sphi 0, %s135
          %p132 = scmp.ge.s32.totalorder %s131, 1
          %s136 = sphi %s126, %s126
          %s137 = sphi %s128, %s128
        $region73: #{tpu_custom_call.1} parent=69 // loop_header_branch
          %134 = sbr.rel (%p132) target = $region77
        $region74: #{tpu_custom_call.1} parent=69 // loop_body
          %v138 = vld [vmem:[%s136] sm:%s129]
          %139 = vst [vmem:[%s137] sm:%s129] %v138
        $region75: #{tpu_custom_call.1} parent=69 // loop_footer
          %s135 = sadd.s32 1, %s131
        $region76: #{tpu_custom_call.1} parent=69 // loop_footer_branch
          %130 = sbr.rel target = $region72
        $region77: #{tpu_custom_call.1} parent=69 // loop_exit
          _
      $region70: #{tpu_custom_call.1} parent=54 // pred_fallthru
        _
    $region55: #{tpu_custom_call.1} parent=1 // pred_fallthru
      _
    // Predicated region
    $region56: #{tpu_custom_call.1} parent=1 // pred_check
      %p105 = pneg %p101
    $region57: #{tpu_custom_call.1} parent=1 // pred_check_branch
      %107 = sbr.rel (%p105) target = $region59
    $region58: #{tpu_custom_call.1} parent=1 // pred_region
      %s108 = sshllo.u32 0, 1
      loop: start=0, step=1, limit=1
      $region60: #{tpu_custom_call.1} parent=58 // loop_pre_header
        _
      $region61: #{tpu_custom_call.1} parent=58 // loop_header
        %s110 = sphi 0, %s114
        %p111 = scmp.ge.s32.totalorder %s110, 1
        %s115 = sphi %s97, %s97
        %s116 = sphi %s98, %s98
      $region62: #{tpu_custom_call.1} parent=58 // loop_header_branch
        %113 = sbr.rel (%p111) target = $region66
      $region63: #{tpu_custom_call.1} parent=58 // loop_body
        %v117 = vld [vmem:[%s115] sm:%s108]
        %118 = vst [vmem:[%s116] sm:%s108] %v117
      $region64: #{tpu_custom_call.1} parent=58 // loop_footer
        %s114 = sadd.s32 1, %s110
      $region65: #{tpu_custom_call.1} parent=58 // loop_footer_branch
        %109 = sbr.rel target = $region61
      $region66: #{tpu_custom_call.1} parent=58 // loop_exit
        _
    $region59: #{tpu_custom_call.1} parent=1 // pred_fallthru
      _
    // Predicated region
    $region78: #{tpu_custom_call.1} parent=1 // pred_check
      _
    $region79: #{tpu_custom_call.1} parent=1 // pred_check_branch
      %142 = sbr.rel (0) target = $region81
    $region80: #{tpu_custom_call.1} parent=1 // pred_region
      %143 = vsyncadd %s99, 16
    $region81: #{tpu_custom_call.1} parent=1 // pred_fallthru
      _
    %s144 = sld [smem:[#allocation5 + $0x2]]
    %p145 = scmp.gt.s32.totalorder %s144, 0
    %s146 = scalar_select %p145, %s144, 0
    %p147 = scmp.lt.s32.totalorder %s146, 99
    %s148 = scalar_select %p147, %s146, 99
    %s149 = scalar_lea.vmem %s3, %s148
    %s150 = scalar_lea.vmem [#allocation2], 2
    %s151 = scalar_lea.sflag [#allocation4], 2
    %p153 = scmp.lt.u32.totalorder 1, 8
    %p154 = pneg %p153
    // Predicated region
    $region82: #{tpu_custom_call.1} parent=1 // pred_check
      _
    $region83: #{tpu_custom_call.1} parent=1 // pred_check_branch
      %156 = sbr.rel (%p153) target = $region85
    $region84: #{tpu_custom_call.1} parent=1 // pred_region
      %s171 = sand.u32 1, 7
      %p172 = scmp.eq.s32.totalorder %s171, 0
      %p173 = pneg %p172
      // Predicated region
      $region97: #{tpu_custom_call.1} parent=84 // pred_check
        _
      $region98: #{tpu_custom_call.1} parent=84 // pred_check_branch
        %175 = sbr.rel (%p172) target = $region100
      $region99: #{tpu_custom_call.1} parent=84 // pred_region
        %s176 = sand.u32 1, 7
        %s177 = ssub.s32 1, %s176
        %s178 = scalar_lea.vmem %s149, %s177
        %s179 = ssub.s32 1, %s176
        %s180 = scalar_lea.vmem %s150, %s179 [#allocation2]
        %s181 = sshllo.u32 0, %s176
        loop: start=0, step=1, limit=1
        $region101: #{tpu_custom_call.1} parent=99 // loop_pre_header
          _
        $region102: #{tpu_custom_call.1} parent=99 // loop_header
          %s183 = sphi 0, %s187
          %p184 = scmp.ge.s32.totalorder %s183, 1
          %s188 = sphi %s178, %s178
          %s189 = sphi %s180, %s180
        $region103: #{tpu_custom_call.1} parent=99 // loop_header_branch
          %186 = sbr.rel (%p184) target = $region107
        $region104: #{tpu_custom_call.1} parent=99 // loop_body
          %v190 = vld [vmem:[%s188] sm:%s181]
          %191 = vst [vmem:[%s189] sm:%s181] %v190
        $region105: #{tpu_custom_call.1} parent=99 // loop_footer
          %s187 = sadd.s32 1, %s183
        $region106: #{tpu_custom_call.1} parent=99 // loop_footer_branch
          %182 = sbr.rel target = $region102
        $region107: #{tpu_custom_call.1} parent=99 // loop_exit
          _
      $region100: #{tpu_custom_call.1} parent=84 // pred_fallthru
        _
    $region85: #{tpu_custom_call.1} parent=1 // pred_fallthru
      _
    // Predicated region
    $region86: #{tpu_custom_call.1} parent=1 // pred_check
      %p157 = pneg %p153
    $region87: #{tpu_custom_call.1} parent=1 // pred_check_branch
      %159 = sbr.rel (%p157) target = $region89
    $region88: #{tpu_custom_call.1} parent=1 // pred_region
      %s160 = sshllo.u32 0, 1
      loop: start=0, step=1, limit=1
      $region90: #{tpu_custom_call.1} parent=88 // loop_pre_header
        _
      $region91: #{tpu_custom_call.1} parent=88 // loop_header
        %s162 = sphi 0, %s166
        %p163 = scmp.ge.s32.totalorder %s162, 1
        %s167 = sphi %s149, %s149
        %s168 = sphi %s150, %s150
      $region92: #{tpu_custom_call.1} parent=88 // loop_header_branch
        %165 = sbr.rel (%p163) target = $region96
      $region93: #{tpu_custom_call.1} parent=88 // loop_body
        %v169 = vld [vmem:[%s167] sm:%s160]
        %170 = vst [vmem:[%s168] sm:%s160] %v169
      $region94: #{tpu_custom_call.1} parent=88 // loop_footer
        %s166 = sadd.s32 1, %s162
      $region95: #{tpu_custom_call.1} parent=88 // loop_footer_branch
        %161 = sbr.rel target = $region91
      $region96: #{tpu_custom_call.1} parent=88 // loop_exit
        _
    $region89: #{tpu_custom_call.1} parent=1 // pred_fallthru
      _
    // Predicated region
    $region108: #{tpu_custom_call.1} parent=1 // pred_check
      _
    $region109: #{tpu_custom_call.1} parent=1 // pred_check_branch
      %194 = sbr.rel (0) target = $region111
    $region110: #{tpu_custom_call.1} parent=1 // pred_region
      %195 = vsyncadd %s151, 16
    $region111: #{tpu_custom_call.1} parent=1 // pred_fallthru
      _
    %s196 = sld [smem:[#allocation5 + $0x3]]
    %p197 = scmp.gt.s32.totalorder %s196, 0
    %s198 = scalar_select %p197, %s196, 0
    %p199 = scmp.lt.s32.totalorder %s198, 99
    %s200 = scalar_select %p199, %s198, 99
    %s201 = scalar_lea.vmem %s3, %s200
    %s202 = scalar_lea.vmem [#allocation2], 3
    %s203 = scalar_lea.sflag [#allocation4], 3
    %p205 = scmp.lt.u32.totalorder 1, 8
    %p206 = pneg %p205
    // Predicated region
    $region112: #{tpu_custom_call.1} parent=1 // pred_check
      _
    $region113: #{tpu_custom_call.1} parent=1 // pred_check_branch
      %208 = sbr.rel (%p205) target = $region115
    $region114: #{tpu_custom_call.1} parent=1 // pred_region
      %s223 = sand.u32 1, 7
      %p224 = scmp.eq.s32.totalorder %s223, 0
      %p225 = pneg %p224
      // Predicated region
      $region127: #{tpu_custom_call.1} parent=114 // pred_check
        _
      $region128: #{tpu_custom_call.1} parent=114 // pred_check_branch
        %227 = sbr.rel (%p224) target = $region130
      $region129: #{tpu_custom_call.1} parent=114 // pred_region
        %s228 = sand.u32 1, 7
        %s229 = ssub.s32 1, %s228
        %s230 = scalar_lea.vmem %s201, %s229
        %s231 = ssub.s32 1, %s228
        %s232 = scalar_lea.vmem %s202, %s231 [#allocation2]
        %s233 = sshllo.u32 0, %s228
        loop: start=0, step=1, limit=1
        $region131: #{tpu_custom_call.1} parent=129 // loop_pre_header
          _
        $region132: #{tpu_custom_call.1} parent=129 // loop_header
          %s235 = sphi 0, %s239
          %p236 = scmp.ge.s32.totalorder %s235, 1
          %s240 = sphi %s230, %s230
          %s241 = sphi %s232, %s232
        $region133: #{tpu_custom_call.1} parent=129 // loop_header_branch
          %238 = sbr.rel (%p236) target = $region137
        $region134: #{tpu_custom_call.1} parent=129 // loop_body
          %v242 = vld [vmem:[%s240] sm:%s233]
          %243 = vst [vmem:[%s241] sm:%s233] %v242
        $region135: #{tpu_custom_call.1} parent=129 // loop_footer
          %s239 = sadd.s32 1, %s235
        $region136: #{tpu_custom_call.1} parent=129 // loop_footer_branch
          %234 = sbr.rel target = $region132
        $region137: #{tpu_custom_call.1} parent=129 // loop_exit
          _
      $region130: #{tpu_custom_call.1} parent=114 // pred_fallthru
        _
    $region115: #{tpu_custom_call.1} parent=1 // pred_fallthru
      _
    // Predicated region
    $region116: #{tpu_custom_call.1} parent=1 // pred_check
      %p209 = pneg %p205
    $region117: #{tpu_custom_call.1} parent=1 // pred_check_branch
      %211 = sbr.rel (%p209) target = $region119
    $region118: #{tpu_custom_call.1} parent=1 // pred_region
      %s212 = sshllo.u32 0, 1
      loop: start=0, step=1, limit=1
      $region120: #{tpu_custom_call.1} parent=118 // loop_pre_header
        _
      $region121: #{tpu_custom_call.1} parent=118 // loop_header
        %s214 = sphi 0, %s218
        %p215 = scmp.ge.s32.totalorder %s214, 1
        %s219 = sphi %s201, %s201
        %s220 = sphi %s202, %s202
      $region122: #{tpu_custom_call.1} parent=118 // loop_header_branch
        %217 = sbr.rel (%p215) target = $region126
      $region123: #{tpu_custom_call.1} parent=118 // loop_body
        %v221 = vld [vmem:[%s219] sm:%s212]
        %222 = vst [vmem:[%s220] sm:%s212] %v221
      $region124: #{tpu_custom_call.1} parent=118 // loop_footer
        %s218 = sadd.s32 1, %s214
      $region125: #{tpu_custom_call.1} parent=118 // loop_footer_branch
        %213 = sbr.rel target = $region121
      $region126: #{tpu_custom_call.1} parent=118 // loop_exit
        _
    $region119: #{tpu_custom_call.1} parent=1 // pred_fallthru
      _
    // Predicated region
    $region138: #{tpu_custom_call.1} parent=1 // pred_check
      _
    $region139: #{tpu_custom_call.1} parent=1 // pred_check_branch
      %246 = sbr.rel (0) target = $region141
    $region140: #{tpu_custom_call.1} parent=1 // pred_region
      %247 = vsyncadd %s203, 16
    $region141: #{tpu_custom_call.1} parent=1 // pred_fallthru
      _
    %s248 = sld [smem:[#allocation5 + $0x4]]
    %p249 = scmp.gt.s32.totalorder %s248, 0
    %s250 = scalar_select %p249, %s248, 0
    %p251 = scmp.lt.s32.totalorder %s250, 99
    %s252 = scalar_select %p251, %s250, 99
    %s253 = scalar_lea.vmem %s3, %s252
    %s254 = scalar_lea.vmem [#allocation2], 4
    %s255 = scalar_lea.sflag [#allocation4], 4
    %p257 = scmp.lt.u32.totalorder 1, 8
    %p258 = pneg %p257
    // Predicated region
    $region142: #{tpu_custom_call.1} parent=1 // pred_check
      _
    $region143: #{tpu_custom_call.1} parent=1 // pred_check_branch
      %260 = sbr.rel (%p257) target = $region145
    $region144: #{tpu_custom_call.1} parent=1 // pred_region
      %s275 = sand.u32 1, 7
      %p276 = scmp.eq.s32.totalorder %s275, 0
      %p277 = pneg %p276
      // Predicated region
      $region157: #{tpu_custom_call.1} parent=144 // pred_check
        _
      $region158: #{tpu_custom_call.1} parent=144 // pred_check_branch
        %279 = sbr.rel (%p276) target = $region160
      $region159: #{tpu_custom_call.1} parent=144 // pred_region
        %s280 = sand.u32 1, 7
        %s281 = ssub.s32 1, %s280
        %s282 = scalar_lea.vmem %s253, %s281
        %s283 = ssub.s32 1, %s280
        %s284 = scalar_lea.vmem %s254, %s283 [#allocation2]
        %s285 = sshllo.u32 0, %s280
        loop: start=0, step=1, limit=1
        $region161: #{tpu_custom_call.1} parent=159 // loop_pre_header
          _
        $region162: #{tpu_custom_call.1} parent=159 // loop_header
          %s287 = sphi 0, %s291
          %p288 = scmp.ge.s32.totalorder %s287, 1
          %s292 = sphi %s282, %s282
          %s293 = sphi %s284, %s284
        $region163: #{tpu_custom_call.1} parent=159 // loop_header_branch
          %290 = sbr.rel (%p288) target = $region167
        $region164: #{tpu_custom_call.1} parent=159 // loop_body
          %v294 = vld [vmem:[%s292] sm:%s285]
          %295 = vst [vmem:[%s293] sm:%s285] %v294
        $region165: #{tpu_custom_call.1} parent=159 // loop_footer
          %s291 = sadd.s32 1, %s287
        $region166: #{tpu_custom_call.1} parent=159 // loop_footer_branch
          %286 = sbr.rel target = $region162
        $region167: #{tpu_custom_call.1} parent=159 // loop_exit
          _
      $region160: #{tpu_custom_call.1} parent=144 // pred_fallthru
        _
    $region145: #{tpu_custom_call.1} parent=1 // pred_fallthru
      _
    // Predicated region
    $region146: #{tpu_custom_call.1} parent=1 // pred_check
      %p261 = pneg %p257
    $region147: #{tpu_custom_call.1} parent=1 // pred_check_branch
      %263 = sbr.rel (%p261) target = $region149
    $region148: #{tpu_custom_call.1} parent=1 // pred_region
      %s264 = sshllo.u32 0, 1
      loop: start=0, step=1, limit=1
      $region150: #{tpu_custom_call.1} parent=148 // loop_pre_header
        _
      $region151: #{tpu_custom_call.1} parent=148 // loop_header
        %s266 = sphi 0, %s270
        %p267 = scmp.ge.s32.totalorder %s266, 1
        %s271 = sphi %s253, %s253
        %s272 = sphi %s254, %s254
      $region152: #{tpu_custom_call.1} parent=148 // loop_header_branch
        %269 = sbr.rel (%p267) target = $region156
      $region153: #{tpu_custom_call.1} parent=148 // loop_body
        %v273 = vld [vmem:[%s271] sm:%s264]
        %274 = vst [vmem:[%s272] sm:%s264] %v273
      $region154: #{tpu_custom_call.1} parent=148 // loop_footer
        %s270 = sadd.s32 1, %s266
      $region155: #{tpu_custom_call.1} parent=148 // loop_footer_branch
        %265 = sbr.rel target = $region151
      $region156: #{tpu_custom_call.1} parent=148 // loop_exit
        _
    $region149: #{tpu_custom_call.1} parent=1 // pred_fallthru
      _
    // Predicated region
    $region168: #{tpu_custom_call.1} parent=1 // pred_check
      _
    $region169: #{tpu_custom_call.1} parent=1 // pred_check_branch
      %298 = sbr.rel (0) target = $region171
    $region170: #{tpu_custom_call.1} parent=1 // pred_region
      %299 = vsyncadd %s255, 16
    $region171: #{tpu_custom_call.1} parent=1 // pred_fallthru
      _
    %s300 = sld [smem:[#allocation5 + $0x5]]
    %p301 = scmp.gt.s32.totalorder %s300, 0
    %s302 = scalar_select %p301, %s300, 0
    %p303 = scmp.lt.s32.totalorder %s302, 99
    %s304 = scalar_select %p303, %s302, 99
    %s305 = scalar_lea.vmem %s3, %s304
    %s306 = scalar_lea.vmem [#allocation2], 5
    %s307 = scalar_lea.sflag [#allocation4], 5
    %p309 = scmp.lt.u32.totalorder 1, 8
    %p310 = pneg %p309
    // Predicated region
    $region172: #{tpu_custom_call.1} parent=1 // pred_check
      _
    $region173: #{tpu_custom_call.1} parent=1 // pred_check_branch
      %312 = sbr.rel (%p309) target = $region175
    $region174: #{tpu_custom_call.1} parent=1 // pred_region
      %s327 = sand.u32 1, 7
      %p328 = scmp.eq.s32.totalorder %s327, 0
      %p329 = pneg %p328
      // Predicated region
      $region187: #{tpu_custom_call.1} parent=174 // pred_check
        _
      $region188: #{tpu_custom_call.1} parent=174 // pred_check_branch
        %331 = sbr.rel (%p328) target = $region190
      $region189: #{tpu_custom_call.1} parent=174 // pred_region
        %s332 = sand.u32 1, 7
        %s333 = ssub.s32 1, %s332
        %s334 = scalar_lea.vmem %s305, %s333
        %s335 = ssub.s32 1, %s332
        %s336 = scalar_lea.vmem %s306, %s335 [#allocation2]
        %s337 = sshllo.u32 0, %s332
        loop: start=0, step=1, limit=1
        $region191: #{tpu_custom_call.1} parent=189 // loop_pre_header
          _
        $region192: #{tpu_custom_call.1} parent=189 // loop_header
          %s339 = sphi 0, %s343
          %p340 = scmp.ge.s32.totalorder %s339, 1
          %s344 = sphi %s334, %s334
          %s345 = sphi %s336, %s336
        $region193: #{tpu_custom_call.1} parent=189 // loop_header_branch
          %342 = sbr.rel (%p340) target = $region197
        $region194: #{tpu_custom_call.1} parent=189 // loop_body
          %v346 = vld [vmem:[%s344] sm:%s337]
          %347 = vst [vmem:[%s345] sm:%s337] %v346
        $region195: #{tpu_custom_call.1} parent=189 // loop_footer
          %s343 = sadd.s32 1, %s339
        $region196: #{tpu_custom_call.1} parent=189 // loop_footer_branch
          %338 = sbr.rel target = $region192
        $region197: #{tpu_custom_call.1} parent=189 // loop_exit
          _
      $region190: #{tpu_custom_call.1} parent=174 // pred_fallthru
        _
    $region175: #{tpu_custom_call.1} parent=1 // pred_fallthru
      _
    // Predicated region
    $region176: #{tpu_custom_call.1} parent=1 // pred_check
      %p313 = pneg %p309
    $region177: #{tpu_custom_call.1} parent=1 // pred_check_branch
      %315 = sbr.rel (%p313) target = $region179
    $region178: #{tpu_custom_call.1} parent=1 // pred_region
      %s316 = sshllo.u32 0, 1
      loop: start=0, step=1, limit=1
      $region180: #{tpu_custom_call.1} parent=178 // loop_pre_header
        _
      $region181: #{tpu_custom_call.1} parent=178 // loop_header
        %s318 = sphi 0, %s322
        %p319 = scmp.ge.s32.totalorder %s318, 1
        %s323 = sphi %s305, %s305
        %s324 = sphi %s306, %s306
      $region182: #{tpu_custom_call.1} parent=178 // loop_header_branch
        %321 = sbr.rel (%p319) target = $region186
      $region183: #{tpu_custom_call.1} parent=178 // loop_body
        %v325 = vld [vmem:[%s323] sm:%s316]
        %326 = vst [vmem:[%s324] sm:%s316] %v325
      $region184: #{tpu_custom_call.1} parent=178 // loop_footer
        %s322 = sadd.s32 1, %s318
      $region185: #{tpu_custom_call.1} parent=178 // loop_footer_branch
        %317 = sbr.rel target = $region181
      $region186: #{tpu_custom_call.1} parent=178 // loop_exit
        _
    $region179: #{tpu_custom_call.1} parent=1 // pred_fallthru
      _
    // Predicated region
    $region198: #{tpu_custom_call.1} parent=1 // pred_check
      _
    $region199: #{tpu_custom_call.1} parent=1 // pred_check_branch
      %350 = sbr.rel (0) target = $region201
    $region200: #{tpu_custom_call.1} parent=1 // pred_region
      %351 = vsyncadd %s307, 16
    $region201: #{tpu_custom_call.1} parent=1 // pred_fallthru
      _
    %s352 = sld [smem:[#allocation5 + $0x6]]
    %p353 = scmp.gt.s32.totalorder %s352, 0
    %s354 = scalar_select %p353, %s352, 0
    %p355 = scmp.lt.s32.totalorder %s354, 99
    %s356 = scalar_select %p355, %s354, 99
    %s357 = scalar_lea.vmem %s3, %s356
    %s358 = scalar_lea.vmem [#allocation2], 6
    %s359 = scalar_lea.sflag [#allocation4], 6
    %p361 = scmp.lt.u32.totalorder 1, 8
    %p362 = pneg %p361
    // Predicated region
    $region202: #{tpu_custom_call.1} parent=1 // pred_check
      _
    $region203: #{tpu_custom_call.1} parent=1 // pred_check_branch
      %364 = sbr.rel (%p361) target = $region205
    $region204: #{tpu_custom_call.1} parent=1 // pred_region
      %s379 = sand.u32 1, 7
      %p380 = scmp.eq.s32.totalorder %s379, 0
      %p381 = pneg %p380
      // Predicated region
      $region217: #{tpu_custom_call.1} parent=204 // pred_check
        _
      $region218: #{tpu_custom_call.1} parent=204 // pred_check_branch
        %383 = sbr.rel (%p380) target = $region220
      $region219: #{tpu_custom_call.1} parent=204 // pred_region
        %s384 = sand.u32 1, 7
        %s385 = ssub.s32 1, %s384
        %s386 = scalar_lea.vmem %s357, %s385
        %s387 = ssub.s32 1, %s384
        %s388 = scalar_lea.vmem %s358, %s387 [#allocation2]
        %s389 = sshllo.u32 0, %s384
        loop: start=0, step=1, limit=1
        $region221: #{tpu_custom_call.1} parent=219 // loop_pre_header
          _
        $region222: #{tpu_custom_call.1} parent=219 // loop_header
          %s391 = sphi 0, %s395
          %p392 = scmp.ge.s32.totalorder %s391, 1
          %s396 = sphi %s386, %s386
          %s397 = sphi %s388, %s388
        $region223: #{tpu_custom_call.1} parent=219 // loop_header_branch
          %394 = sbr.rel (%p392) target = $region227
        $region224: #{tpu_custom_call.1} parent=219 // loop_body
          %v398 = vld [vmem:[%s396] sm:%s389]
          %399 = vst [vmem:[%s397] sm:%s389] %v398
        $region225: #{tpu_custom_call.1} parent=219 // loop_footer
          %s395 = sadd.s32 1, %s391
        $region226: #{tpu_custom_call.1} parent=219 // loop_footer_branch
          %390 = sbr.rel target = $region222
        $region227: #{tpu_custom_call.1} parent=219 // loop_exit
          _
      $region220: #{tpu_custom_call.1} parent=204 // pred_fallthru
        _
    $region205: #{tpu_custom_call.1} parent=1 // pred_fallthru
      _
    // Predicated region
    $region206: #{tpu_custom_call.1} parent=1 // pred_check
      %p365 = pneg %p361
    $region207: #{tpu_custom_call.1} parent=1 // pred_check_branch
      %367 = sbr.rel (%p365) target = $region209
    $region208: #{tpu_custom_call.1} parent=1 // pred_region
      %s368 = sshllo.u32 0, 1
      loop: start=0, step=1, limit=1
      $region210: #{tpu_custom_call.1} parent=208 // loop_pre_header
        _
      $region211: #{tpu_custom_call.1} parent=208 // loop_header
        %s370 = sphi 0, %s374
        %p371 = scmp.ge.s32.totalorder %s370, 1
        %s375 = sphi %s357, %s357
        %s376 = sphi %s358, %s358
      $region212: #{tpu_custom_call.1} parent=208 // loop_header_branch
        %373 = sbr.rel (%p371) target = $region216
      $region213: #{tpu_custom_call.1} parent=208 // loop_body
        %v377 = vld [vmem:[%s375] sm:%s368]
        %378 = vst [vmem:[%s376] sm:%s368] %v377
      $region214: #{tpu_custom_call.1} parent=208 // loop_footer
        %s374 = sadd.s32 1, %s370
      $region215: #{tpu_custom_call.1} parent=208 // loop_footer_branch
        %369 = sbr.rel target = $region211
      $region216: #{tpu_custom_call.1} parent=208 // loop_exit
        _
    $region209: #{tpu_custom_call.1} parent=1 // pred_fallthru
      _
    // Predicated region
    $region228: #{tpu_custom_call.1} parent=1 // pred_check
      _
    $region229: #{tpu_custom_call.1} parent=1 // pred_check_branch
      %402 = sbr.rel (0) target = $region231
    $region230: #{tpu_custom_call.1} parent=1 // pred_region
      %403 = vsyncadd %s359, 16
    $region231: #{tpu_custom_call.1} parent=1 // pred_fallthru
      _
    %s404 = sld [smem:[#allocation5 + $0x7]]
    %p405 = scmp.gt.s32.totalorder %s404, 0
    %s406 = scalar_select %p405, %s404, 0
    %p407 = scmp.lt.s32.totalorder %s406, 99
    %s408 = scalar_select %p407, %s406, 99
    %s409 = scalar_lea.vmem %s3, %s408
    %s410 = scalar_lea.vmem [#allocation2], 7
    %s411 = scalar_lea.sflag [#allocation4], 7
    %p413 = scmp.lt.u32.totalorder 1, 8
    %p414 = pneg %p413
    // Predicated region
    $region232: #{tpu_custom_call.1} parent=1 // pred_check
      _
    $region233: #{tpu_custom_call.1} parent=1 // pred_check_branch
      %416 = sbr.rel (%p413) target = $region235
    $region234: #{tpu_custom_call.1} parent=1 // pred_region
      %s431 = sand.u32 1, 7
      %p432 = scmp.eq.s32.totalorder %s431, 0
      %p433 = pneg %p432
      // Predicated region
      $region247: #{tpu_custom_call.1} parent=234 // pred_check
        _
      $region248: #{tpu_custom_call.1} parent=234 // pred_check_branch
        %435 = sbr.rel (%p432) target = $region250
      $region249: #{tpu_custom_call.1} parent=234 // pred_region
        %s436 = sand.u32 1, 7
        %s437 = ssub.s32 1, %s436
        %s438 = scalar_lea.vmem %s409, %s437
        %s439 = ssub.s32 1, %s436
        %s440 = scalar_lea.vmem %s410, %s439 [#allocation2]
        %s441 = sshllo.u32 0, %s436
        loop: start=0, step=1, limit=1
        $region251: #{tpu_custom_call.1} parent=249 // loop_pre_header
          _
        $region252: #{tpu_custom_call.1} parent=249 // loop_header
          %s443 = sphi 0, %s447
          %p444 = scmp.ge.s32.totalorder %s443, 1
          %s448 = sphi %s438, %s438
          %s449 = sphi %s440, %s440
        $region253: #{tpu_custom_call.1} parent=249 // loop_header_branch
          %446 = sbr.rel (%p444) target = $region257
        $region254: #{tpu_custom_call.1} parent=249 // loop_body
          %v450 = vld [vmem:[%s448] sm:%s441]
          %451 = vst [vmem:[%s449] sm:%s441] %v450
        $region255: #{tpu_custom_call.1} parent=249 // loop_footer
          %s447 = sadd.s32 1, %s443
        $region256: #{tpu_custom_call.1} parent=249 // loop_footer_branch
          %442 = sbr.rel target = $region252
        $region257: #{tpu_custom_call.1} parent=249 // loop_exit
          _
      $region250: #{tpu_custom_call.1} parent=234 // pred_fallthru
        _
    $region235: #{tpu_custom_call.1} parent=1 // pred_fallthru
      _
    // Predicated region
    $region236: #{tpu_custom_call.1} parent=1 // pred_check
      %p417 = pneg %p413
    $region237: #{tpu_custom_call.1} parent=1 // pred_check_branch
      %419 = sbr.rel (%p417) target = $region239
    $region238: #{tpu_custom_call.1} parent=1 // pred_region
      %s420 = sshllo.u32 0, 1
      loop: start=0, step=1, limit=1
      $region240: #{tpu_custom_call.1} parent=238 // loop_pre_header
        _
      $region241: #{tpu_custom_call.1} parent=238 // loop_header
        %s422 = sphi 0, %s426
        %p423 = scmp.ge.s32.totalorder %s422, 1
        %s427 = sphi %s409, %s409
        %s428 = sphi %s410, %s410
      $region242: #{tpu_custom_call.1} parent=238 // loop_header_branch
        %425 = sbr.rel (%p423) target = $region246
      $region243: #{tpu_custom_call.1} parent=238 // loop_body
        %v429 = vld [vmem:[%s427] sm:%s420]
        %430 = vst [vmem:[%s428] sm:%s420] %v429
      $region244: #{tpu_custom_call.1} parent=238 // loop_footer
        %s426 = sadd.s32 1, %s422
      $region245: #{tpu_custom_call.1} parent=238 // loop_footer_branch
        %421 = sbr.rel target = $region241
      $region246: #{tpu_custom_call.1} parent=238 // loop_exit
        _
    $region239: #{tpu_custom_call.1} parent=1 // pred_fallthru
      _
    // Predicated region
    $region258: #{tpu_custom_call.1} parent=1 // pred_check
      _
    $region259: #{tpu_custom_call.1} parent=1 // pred_check_branch
      %454 = sbr.rel (0) target = $region261
    $region260: #{tpu_custom_call.1} parent=1 // pred_region
      %455 = vsyncadd %s411, 16
    $region261: #{tpu_custom_call.1} parent=1 // pred_fallthru
      _
    %s456 = sld [smem:[#allocation8]]
    %p457 = scmp.gt.s32.totalorder %s456, 0
    %s458 = scalar_select %p457, %s456, 0
    %p459 = scmp.lt.s32.totalorder %s458, 49
    %s460 = scalar_select %p459, %s458, 49
    %s461 = scalar_lea.vmem %s4, %s460
    %s462 = scalar_lea.sflag [#allocation4], 8
    %p464 = scmp.lt.u32.totalorder 1, 8
    %p465 = pneg %p464
    // Predicated region
    $region262: #{tpu_custom_call.1} parent=1 // pred_check
      _
    $region263: #{tpu_custom_call.1} parent=1 // pred_check_branch
      %467 = sbr.rel (%p464) target = $region265
    $region264: #{tpu_custom_call.1} parent=1 // pred_region
      %s482 = sand.u32 1, 7
      %p483 = scmp.eq.s32.totalorder %s482, 0
      %p484 = pneg %p483
      // Predicated region
      $region277: #{tpu_custom_call.1} parent=264 // pred_check
        _
      $region278: #{tpu_custom_call.1} parent=264 // pred_check_branch
        %486 = sbr.rel (%p483) target = $region280
      $region279: #{tpu_custom_call.1} parent=264 // pred_region
        %s487 = sand.u32 1, 7
        %s488 = ssub.s32 1, %s487
        %s489 = scalar_lea.vmem %s461, %s488
        %s490 = ssub.s32 1, %s487
        %s491 = scalar_lea.vmem [#allocation3], %s490
        %s492 = sshllo.u32 0, %s487
        loop: start=0, step=1, limit=1
        $region281: #{tpu_custom_call.1} parent=279 // loop_pre_header
          _
        $region282: #{tpu_custom_call.1} parent=279 // loop_header
          %s494 = sphi 0, %s498
          %p495 = scmp.ge.s32.totalorder %s494, 1
          %s499 = sphi %s489, %s489
          %s500 = sphi %s491, %s491
        $region283: #{tpu_custom_call.1} parent=279 // loop_header_branch
          %497 = sbr.rel (%p495) target = $region287
        $region284: #{tpu_custom_call.1} parent=279 // loop_body
          %v501 = vld [vmem:[%s499] sm:%s492]
          %502 = vst [vmem:[%s500] sm:%s492] %v501
        $region285: #{tpu_custom_call.1} parent=279 // loop_footer
          %s498 = sadd.s32 1, %s494
        $region286: #{tpu_custom_call.1} parent=279 // loop_footer_branch
          %493 = sbr.rel target = $region282
        $region287: #{tpu_custom_call.1} parent=279 // loop_exit
          _
      $region280: #{tpu_custom_call.1} parent=264 // pred_fallthru
        _
    $region265: #{tpu_custom_call.1} parent=1 // pred_fallthru
      _
    // Predicated region
    $region266: #{tpu_custom_call.1} parent=1 // pred_check
      %p468 = pneg %p464
    $region267: #{tpu_custom_call.1} parent=1 // pred_check_branch
      %470 = sbr.rel (%p468) target = $region269
    $region268: #{tpu_custom_call.1} parent=1 // pred_region
      %s471 = sshllo.u32 0, 1
      loop: start=0, step=1, limit=1
      $region270: #{tpu_custom_call.1} parent=268 // loop_pre_header
        _
      $region271: #{tpu_custom_call.1} parent=268 // loop_header
        %s473 = sphi 0, %s477
        %p474 = scmp.ge.s32.totalorder %s473, 1
        %s478 = sphi %s461, %s461
        %s479 = sphi [#allocation3], [#allocation3]
      $region272: #{tpu_custom_call.1} parent=268 // loop_header_branch
        %476 = sbr.rel (%p474) target = $region276
      $region273: #{tpu_custom_call.1} parent=268 // loop_body
        %v480 = vld [vmem:[%s478] sm:%s471]
        %481 = vst [vmem:[%s479] sm:%s471] %v480
      $region274: #{tpu_custom_call.1} parent=268 // loop_footer
        %s477 = sadd.s32 1, %s473
      $region275: #{tpu_custom_call.1} parent=268 // loop_footer_branch
        %472 = sbr.rel target = $region271
      $region276: #{tpu_custom_call.1} parent=268 // loop_exit
        _
    $region269: #{tpu_custom_call.1} parent=1 // pred_fallthru
      _
    // Predicated region
    $region288: #{tpu_custom_call.1} parent=1 // pred_check
      _
    $region289: #{tpu_custom_call.1} parent=1 // pred_check_branch
      %505 = sbr.rel (0) target = $region291
    $region290: #{tpu_custom_call.1} parent=1 // pred_region
      %506 = vsyncadd %s462, 16
    $region291: #{tpu_custom_call.1} parent=1 // pred_fallthru
      _
    %s507 = sld [smem:[#allocation8 + $0x1]]
    %p508 = scmp.gt.s32.totalorder %s507, 0
    %s509 = scalar_select %p508, %s507, 0
    %p510 = scmp.lt.s32.totalorder %s509, 49
    %s511 = scalar_select %p510, %s509, 49
    %s512 = scalar_lea.vmem %s4, %s511
    %s513 = scalar_lea.vmem [#allocation3], 1
    %s514 = scalar_lea.sflag [#allocation4], 9
    %p516 = scmp.lt.u32.totalorder 1, 8
    %p517 = pneg %p516
    // Predicated region
    $region292: #{tpu_custom_call.1} parent=1 // pred_check
      _
    $region293: #{tpu_custom_call.1} parent=1 // pred_check_branch
      %519 = sbr.rel (%p516) target = $region295
    $region294: #{tpu_custom_call.1} parent=1 // pred_region
      %s534 = sand.u32 1, 7
      %p535 = scmp.eq.s32.totalorder %s534, 0
      %p536 = pneg %p535
      // Predicated region
      $region307: #{tpu_custom_call.1} parent=294 // pred_check
        _
      $region308: #{tpu_custom_call.1} parent=294 // pred_check_branch
        %538 = sbr.rel (%p535) target = $region310
      $region309: #{tpu_custom_call.1} parent=294 // pred_region
        %s539 = sand.u32 1, 7
        %s540 = ssub.s32 1, %s539
        %s541 = scalar_lea.vmem %s512, %s540
        %s542 = ssub.s32 1, %s539
        %s543 = scalar_lea.vmem %s513, %s542 [#allocation3]
        %s544 = sshllo.u32 0, %s539
        loop: start=0, step=1, limit=1
        $region311: #{tpu_custom_call.1} parent=309 // loop_pre_header
          _
        $region312: #{tpu_custom_call.1} parent=309 // loop_header
          %s546 = sphi 0, %s550
          %p547 = scmp.ge.s32.totalorder %s546, 1
          %s551 = sphi %s541, %s541
          %s552 = sphi %s543, %s543
        $region313: #{tpu_custom_call.1} parent=309 // loop_header_branch
          %549 = sbr.rel (%p547) target = $region317
        $region314: #{tpu_custom_call.1} parent=309 // loop_body
          %v553 = vld [vmem:[%s551] sm:%s544]
          %554 = vst [vmem:[%s552] sm:%s544] %v553
        $region315: #{tpu_custom_call.1} parent=309 // loop_footer
          %s550 = sadd.s32 1, %s546
        $region316: #{tpu_custom_call.1} parent=309 // loop_footer_branch
          %545 = sbr.rel target = $region312
        $region317: #{tpu_custom_call.1} parent=309 // loop_exit
          _
      $region310: #{tpu_custom_call.1} parent=294 // pred_fallthru
        _
    $region295: #{tpu_custom_call.1} parent=1 // pred_fallthru
      _
    // Predicated region
    $region296: #{tpu_custom_call.1} parent=1 // pred_check
      %p520 = pneg %p516
    $region297: #{tpu_custom_call.1} parent=1 // pred_check_branch
      %522 = sbr.rel (%p520) target = $region299
    $region298: #{tpu_custom_call.1} parent=1 // pred_region
      %s523 = sshllo.u32 0, 1
      loop: start=0, step=1, limit=1
      $region300: #{tpu_custom_call.1} parent=298 // loop_pre_header
        _
      $region301: #{tpu_custom_call.1} parent=298 // loop_header
        %s525 = sphi 0, %s529
        %p526 = scmp.ge.s32.totalorder %s525, 1
        %s530 = sphi %s512, %s512
        %s531 = sphi %s513, %s513
      $region302: #{tpu_custom_call.1} parent=298 // loop_header_branch
        %528 = sbr.rel (%p526) target = $region306
      $region303: #{tpu_custom_call.1} parent=298 // loop_body
        %v532 = vld [vmem:[%s530] sm:%s523]
        %533 = vst [vmem:[%s531] sm:%s523] %v532
      $region304: #{tpu_custom_call.1} parent=298 // loop_footer
        %s529 = sadd.s32 1, %s525
      $region305: #{tpu_custom_call.1} parent=298 // loop_footer_branch
        %524 = sbr.rel target = $region301
      $region306: #{tpu_custom_call.1} parent=298 // loop_exit
        _
    $region299: #{tpu_custom_call.1} parent=1 // pred_fallthru
      _
    // Predicated region
    $region318: #{tpu_custom_call.1} parent=1 // pred_check
      _
    $region319: #{tpu_custom_call.1} parent=1 // pred_check_branch
      %557 = sbr.rel (0) target = $region321
    $region320: #{tpu_custom_call.1} parent=1 // pred_region
      %558 = vsyncadd %s514, 16
    $region321: #{tpu_custom_call.1} parent=1 // pred_fallthru
      _
    %s559 = sld [smem:[#allocation8 + $0x2]]
    %p560 = scmp.gt.s32.totalorder %s559, 0
    %s561 = scalar_select %p560, %s559, 0
    %p562 = scmp.lt.s32.totalorder %s561, 49
    %s563 = scalar_select %p562, %s561, 49
    %s564 = scalar_lea.vmem %s4, %s563
    %s565 = scalar_lea.vmem [#allocation3], 2
    %s566 = scalar_lea.sflag [#allocation4], 10
    %p568 = scmp.lt.u32.totalorder 1, 8
    %p569 = pneg %p568
    // Predicated region
    $region322: #{tpu_custom_call.1} parent=1 // pred_check
      _
    $region323: #{tpu_custom_call.1} parent=1 // pred_check_branch
      %571 = sbr.rel (%p568) target = $region325
    $region324: #{tpu_custom_call.1} parent=1 // pred_region
      %s586 = sand.u32 1, 7
      %p587 = scmp.eq.s32.totalorder %s586, 0
      %p588 = pneg %p587
      // Predicated region
      $region337: #{tpu_custom_call.1} parent=324 // pred_check
        _
      $region338: #{tpu_custom_call.1} parent=324 // pred_check_branch
        %590 = sbr.rel (%p587) target = $region340
      $region339: #{tpu_custom_call.1} parent=324 // pred_region
        %s591 = sand.u32 1, 7
        %s592 = ssub.s32 1, %s591
        %s593 = scalar_lea.vmem %s564, %s592
        %s594 = ssub.s32 1, %s591
        %s595 = scalar_lea.vmem %s565, %s594 [#allocation3]
        %s596 = sshllo.u32 0, %s591
        loop: start=0, step=1, limit=1
        $region341: #{tpu_custom_call.1} parent=339 // loop_pre_header
          _
        $region342: #{tpu_custom_call.1} parent=339 // loop_header
          %s598 = sphi 0, %s602
          %p599 = scmp.ge.s32.totalorder %s598, 1
          %s603 = sphi %s593, %s593
          %s604 = sphi %s595, %s595
        $region343: #{tpu_custom_call.1} parent=339 // loop_header_branch
          %601 = sbr.rel (%p599) target = $region347
        $region344: #{tpu_custom_call.1} parent=339 // loop_body
          %v605 = vld [vmem:[%s603] sm:%s596]
          %606 = vst [vmem:[%s604] sm:%s596] %v605
        $region345: #{tpu_custom_call.1} parent=339 // loop_footer
          %s602 = sadd.s32 1, %s598
        $region346: #{tpu_custom_call.1} parent=339 // loop_footer_branch
          %597 = sbr.rel target = $region342
        $region347: #{tpu_custom_call.1} parent=339 // loop_exit
          _
      $region340: #{tpu_custom_call.1} parent=324 // pred_fallthru
        _
    $region325: #{tpu_custom_call.1} parent=1 // pred_fallthru
      _
    // Predicated region
    $region326: #{tpu_custom_call.1} parent=1 // pred_check
      %p572 = pneg %p568
    $region327: #{tpu_custom_call.1} parent=1 // pred_check_branch
      %574 = sbr.rel (%p572) target = $region329
    $region328: #{tpu_custom_call.1} parent=1 // pred_region
      %s575 = sshllo.u32 0, 1
      loop: start=0, step=1, limit=1
      $region330: #{tpu_custom_call.1} parent=328 // loop_pre_header
        _
      $region331: #{tpu_custom_call.1} parent=328 // loop_header
        %s577 = sphi 0, %s581
        %p578 = scmp.ge.s32.totalorder %s577, 1
        %s582 = sphi %s564, %s564
        %s583 = sphi %s565, %s565
      $region332: #{tpu_custom_call.1} parent=328 // loop_header_branch
        %580 = sbr.rel (%p578) target = $region336
      $region333: #{tpu_custom_call.1} parent=328 // loop_body
        %v584 = vld [vmem:[%s582] sm:%s575]
        %585 = vst [vmem:[%s583] sm:%s575] %v584
      $region334: #{tpu_custom_call.1} parent=328 // loop_footer
        %s581 = sadd.s32 1, %s577
      $region335: #{tpu_custom_call.1} parent=328 // loop_footer_branch
        %576 = sbr.rel target = $region331
      $region336: #{tpu_custom_call.1} parent=328 // loop_exit
        _
    $region329: #{tpu_custom_call.1} parent=1 // pred_fallthru
      _
    // Predicated region
    $region348: #{tpu_custom_call.1} parent=1 // pred_check
      _
    $region349: #{tpu_custom_call.1} parent=1 // pred_check_branch
      %609 = sbr.rel (0) target = $region351
    $region350: #{tpu_custom_call.1} parent=1 // pred_region
      %610 = vsyncadd %s566, 16
    $region351: #{tpu_custom_call.1} parent=1 // pred_fallthru
      _
    %s611 = sld [smem:[#allocation8 + $0x3]]
    %p612 = scmp.gt.s32.totalorder %s611, 0
    %s613 = scalar_select %p612, %s611, 0
    %p614 = scmp.lt.s32.totalorder %s613, 49
    %s615 = scalar_select %p614, %s613, 49
    %s616 = scalar_lea.vmem %s4, %s615
    %s617 = scalar_lea.vmem [#allocation3], 3
    %s618 = scalar_lea.sflag [#allocation4], 11
    %p620 = scmp.lt.u32.totalorder 1, 8
    %p621 = pneg %p620
    // Predicated region
    $region352: #{tpu_custom_call.1} parent=1 // pred_check
      _
    $region353: #{tpu_custom_call.1} parent=1 // pred_check_branch
      %623 = sbr.rel (%p620) target = $region355
    $region354: #{tpu_custom_call.1} parent=1 // pred_region
      %s638 = sand.u32 1, 7
      %p639 = scmp.eq.s32.totalorder %s638, 0
      %p640 = pneg %p639
      // Predicated region
      $region367: #{tpu_custom_call.1} parent=354 // pred_check
        _
      $region368: #{tpu_custom_call.1} parent=354 // pred_check_branch
        %642 = sbr.rel (%p639) target = $region370
      $region369: #{tpu_custom_call.1} parent=354 // pred_region
        %s643 = sand.u32 1, 7
        %s644 = ssub.s32 1, %s643
        %s645 = scalar_lea.vmem %s616, %s644
        %s646 = ssub.s32 1, %s643
        %s647 = scalar_lea.vmem %s617, %s646 [#allocation3]
        %s648 = sshllo.u32 0, %s643
        loop: start=0, step=1, limit=1
        $region371: #{tpu_custom_call.1} parent=369 // loop_pre_header
          _
        $region372: #{tpu_custom_call.1} parent=369 // loop_header
          %s650 = sphi 0, %s654
          %p651 = scmp.ge.s32.totalorder %s650, 1
          %s655 = sphi %s645, %s645
          %s656 = sphi %s647, %s647
        $region373: #{tpu_custom_call.1} parent=369 // loop_header_branch
          %653 = sbr.rel (%p651) target = $region377
        $region374: #{tpu_custom_call.1} parent=369 // loop_body
          %v657 = vld [vmem:[%s655] sm:%s648]
          %658 = vst [vmem:[%s656] sm:%s648] %v657
        $region375: #{tpu_custom_call.1} parent=369 // loop_footer
          %s654 = sadd.s32 1, %s650
        $region376: #{tpu_custom_call.1} parent=369 // loop_footer_branch
          %649 = sbr.rel target = $region372
        $region377: #{tpu_custom_call.1} parent=369 // loop_exit
          _
      $region370: #{tpu_custom_call.1} parent=354 // pred_fallthru
        _
    $region355: #{tpu_custom_call.1} parent=1 // pred_fallthru
      _
    // Predicated region
    $region356: #{tpu_custom_call.1} parent=1 // pred_check
      %p624 = pneg %p620
    $region357: #{tpu_custom_call.1} parent=1 // pred_check_branch
      %626 = sbr.rel (%p624) target = $region359
    $region358: #{tpu_custom_call.1} parent=1 // pred_region
      %s627 = sshllo.u32 0, 1
      loop: start=0, step=1, limit=1
      $region360: #{tpu_custom_call.1} parent=358 // loop_pre_header
        _
      $region361: #{tpu_custom_call.1} parent=358 // loop_header
        %s629 = sphi 0, %s633
        %p630 = scmp.ge.s32.totalorder %s629, 1
        %s634 = sphi %s616, %s616
        %s635 = sphi %s617, %s617
      $region362: #{tpu_custom_call.1} parent=358 // loop_header_branch
        %632 = sbr.rel (%p630) target = $region366
      $region363: #{tpu_custom_call.1} parent=358 // loop_body
        %v636 = vld [vmem:[%s634] sm:%s627]
        %637 = vst [vmem:[%s635] sm:%s627] %v636
      $region364: #{tpu_custom_call.1} parent=358 // loop_footer
        %s633 = sadd.s32 1, %s629
      $region365: #{tpu_custom_call.1} parent=358 // loop_footer_branch
        %628 = sbr.rel target = $region361
      $region366: #{tpu_custom_call.1} parent=358 // loop_exit
        _
    $region359: #{tpu_custom_call.1} parent=1 // pred_fallthru
      _
    // Predicated region
    $region378: #{tpu_custom_call.1} parent=1 // pred_check
      _
    $region379: #{tpu_custom_call.1} parent=1 // pred_check_branch
      %661 = sbr.rel (0) target = $region381
    $region380: #{tpu_custom_call.1} parent=1 // pred_region
      %662 = vsyncadd %s618, 16
    $region381: #{tpu_custom_call.1} parent=1 // pred_fallthru
      _
    %s663 = sld [smem:[#allocation8 + $0x4]]
    %p664 = scmp.gt.s32.totalorder %s663, 0
    %s665 = scalar_select %p664, %s663, 0
    %p666 = scmp.lt.s32.totalorder %s665, 49
    %s667 = scalar_select %p666, %s665, 49
    %s668 = scalar_lea.vmem %s4, %s667
    %s669 = scalar_lea.vmem [#allocation3], 4
    %s670 = scalar_lea.sflag [#allocation4], 12
    %p672 = scmp.lt.u32.totalorder 1, 8
    %p673 = pneg %p672
    // Predicated region
    $region382: #{tpu_custom_call.1} parent=1 // pred_check
      _
    $region383: #{tpu_custom_call.1} parent=1 // pred_check_branch
      %675 = sbr.rel (%p672) target = $region385
    $region384: #{tpu_custom_call.1} parent=1 // pred_region
      %s690 = sand.u32 1, 7
      %p691 = scmp.eq.s32.totalorder %s690, 0
      %p692 = pneg %p691
      // Predicated region
      $region397: #{tpu_custom_call.1} parent=384 // pred_check
        _
      $region398: #{tpu_custom_call.1} parent=384 // pred_check_branch
        %694 = sbr.rel (%p691) target = $region400
      $region399: #{tpu_custom_call.1} parent=384 // pred_region
        %s695 = sand.u32 1, 7
        %s696 = ssub.s32 1, %s695
        %s697 = scalar_lea.vmem %s668, %s696
        %s698 = ssub.s32 1, %s695
        %s699 = scalar_lea.vmem %s669, %s698 [#allocation3]
        %s700 = sshllo.u32 0, %s695
        loop: start=0, step=1, limit=1
        $region401: #{tpu_custom_call.1} parent=399 // loop_pre_header
          _
        $region402: #{tpu_custom_call.1} parent=399 // loop_header
          %s702 = sphi 0, %s706
          %p703 = scmp.ge.s32.totalorder %s702, 1
          %s707 = sphi %s697, %s697
          %s708 = sphi %s699, %s699
        $region403: #{tpu_custom_call.1} parent=399 // loop_header_branch
          %705 = sbr.rel (%p703) target = $region407
        $region404: #{tpu_custom_call.1} parent=399 // loop_body
          %v709 = vld [vmem:[%s707] sm:%s700]
          %710 = vst [vmem:[%s708] sm:%s700] %v709
        $region405: #{tpu_custom_call.1} parent=399 // loop_footer
          %s706 = sadd.s32 1, %s702
        $region406: #{tpu_custom_call.1} parent=399 // loop_footer_branch
          %701 = sbr.rel target = $region402
        $region407: #{tpu_custom_call.1} parent=399 // loop_exit
          _
      $region400: #{tpu_custom_call.1} parent=384 // pred_fallthru
        _
    $region385: #{tpu_custom_call.1} parent=1 // pred_fallthru
      _
    // Predicated region
    $region386: #{tpu_custom_call.1} parent=1 // pred_check
      %p676 = pneg %p672
    $region387: #{tpu_custom_call.1} parent=1 // pred_check_branch
      %678 = sbr.rel (%p676) target = $region389
    $region388: #{tpu_custom_call.1} parent=1 // pred_region
      %s679 = sshllo.u32 0, 1
      loop: start=0, step=1, limit=1
      $region390: #{tpu_custom_call.1} parent=388 // loop_pre_header
        _
      $region391: #{tpu_custom_call.1} parent=388 // loop_header
        %s681 = sphi 0, %s685
        %p682 = scmp.ge.s32.totalorder %s681, 1
        %s686 = sphi %s668, %s668
        %s687 = sphi %s669, %s669
      $region392: #{tpu_custom_call.1} parent=388 // loop_header_branch
        %684 = sbr.rel (%p682) target = $region396
      $region393: #{tpu_custom_call.1} parent=388 // loop_body
        %v688 = vld [vmem:[%s686] sm:%s679]
        %689 = vst [vmem:[%s687] sm:%s679] %v688
      $region394: #{tpu_custom_call.1} parent=388 // loop_footer
        %s685 = sadd.s32 1, %s681
      $region395: #{tpu_custom_call.1} parent=388 // loop_footer_branch
        %680 = sbr.rel target = $region391
      $region396: #{tpu_custom_call.1} parent=388 // loop_exit
        _
    $region389: #{tpu_custom_call.1} parent=1 // pred_fallthru
      _
    // Predicated region
    $region408: #{tpu_custom_call.1} parent=1 // pred_check
      _
    $region409: #{tpu_custom_call.1} parent=1 // pred_check_branch
      %713 = sbr.rel (0) target = $region411
    $region410: #{tpu_custom_call.1} parent=1 // pred_region
      %714 = vsyncadd %s670, 16
    $region411: #{tpu_custom_call.1} parent=1 // pred_fallthru
      _
    %s715 = sld [smem:[#allocation8 + $0x5]]
    %p716 = scmp.gt.s32.totalorder %s715, 0
    %s717 = scalar_select %p716, %s715, 0
    %p718 = scmp.lt.s32.totalorder %s717, 49
    %s719 = scalar_select %p718, %s717, 49
    %s720 = scalar_lea.vmem %s4, %s719
    %s721 = scalar_lea.vmem [#allocation3], 5
    %s722 = scalar_lea.sflag [#allocation4], 13
    %p724 = scmp.lt.u32.totalorder 1, 8
    %p725 = pneg %p724
    // Predicated region
    $region412: #{tpu_custom_call.1} parent=1 // pred_check
      _
    $region413: #{tpu_custom_call.1} parent=1 // pred_check_branch
      %727 = sbr.rel (%p724) target = $region415
    $region414: #{tpu_custom_call.1} parent=1 // pred_region
      %s742 = sand.u32 1, 7
      %p743 = scmp.eq.s32.totalorder %s742, 0
      %p744 = pneg %p743
      // Predicated region
      $region427: #{tpu_custom_call.1} parent=414 // pred_check
        _
      $region428: #{tpu_custom_call.1} parent=414 // pred_check_branch
        %746 = sbr.rel (%p743) target = $region430
      $region429: #{tpu_custom_call.1} parent=414 // pred_region
        %s747 = sand.u32 1, 7
        %s748 = ssub.s32 1, %s747
        %s749 = scalar_lea.vmem %s720, %s748
        %s750 = ssub.s32 1, %s747
        %s751 = scalar_lea.vmem %s721, %s750 [#allocation3]
        %s752 = sshllo.u32 0, %s747
        loop: start=0, step=1, limit=1
        $region431: #{tpu_custom_call.1} parent=429 // loop_pre_header
          _
        $region432: #{tpu_custom_call.1} parent=429 // loop_header
          %s754 = sphi 0, %s758
          %p755 = scmp.ge.s32.totalorder %s754, 1
          %s759 = sphi %s749, %s749
          %s760 = sphi %s751, %s751
        $region433: #{tpu_custom_call.1} parent=429 // loop_header_branch
          %757 = sbr.rel (%p755) target = $region437
        $region434: #{tpu_custom_call.1} parent=429 // loop_body
          %v761 = vld [vmem:[%s759] sm:%s752]
          %762 = vst [vmem:[%s760] sm:%s752] %v761
        $region435: #{tpu_custom_call.1} parent=429 // loop_footer
          %s758 = sadd.s32 1, %s754
        $region436: #{tpu_custom_call.1} parent=429 // loop_footer_branch
          %753 = sbr.rel target = $region432
        $region437: #{tpu_custom_call.1} parent=429 // loop_exit
          _
      $region430: #{tpu_custom_call.1} parent=414 // pred_fallthru
        _
    $region415: #{tpu_custom_call.1} parent=1 // pred_fallthru
      _
    // Predicated region
    $region416: #{tpu_custom_call.1} parent=1 // pred_check
      %p728 = pneg %p724
    $region417: #{tpu_custom_call.1} parent=1 // pred_check_branch
      %730 = sbr.rel (%p728) target = $region419
    $region418: #{tpu_custom_call.1} parent=1 // pred_region
      %s731 = sshllo.u32 0, 1
      loop: start=0, step=1, limit=1
      $region420: #{tpu_custom_call.1} parent=418 // loop_pre_header
        _
      $region421: #{tpu_custom_call.1} parent=418 // loop_header
        %s733 = sphi 0, %s737
        %p734 = scmp.ge.s32.totalorder %s733, 1
        %s738 = sphi %s720, %s720
        %s739 = sphi %s721, %s721
      $region422: #{tpu_custom_call.1} parent=418 // loop_header_branch
        %736 = sbr.rel (%p734) target = $region426
      $region423: #{tpu_custom_call.1} parent=418 // loop_body
        %v740 = vld [vmem:[%s738] sm:%s731]
        %741 = vst [vmem:[%s739] sm:%s731] %v740
      $region424: #{tpu_custom_call.1} parent=418 // loop_footer
        %s737 = sadd.s32 1, %s733
      $region425: #{tpu_custom_call.1} parent=418 // loop_footer_branch
        %732 = sbr.rel target = $region421
      $region426: #{tpu_custom_call.1} parent=418 // loop_exit
        _
    $region419: #{tpu_custom_call.1} parent=1 // pred_fallthru
      _
    // Predicated region
    $region438: #{tpu_custom_call.1} parent=1 // pred_check
      _
    $region439: #{tpu_custom_call.1} parent=1 // pred_check_branch
      %765 = sbr.rel (0) target = $region441
    $region440: #{tpu_custom_call.1} parent=1 // pred_region
      %766 = vsyncadd %s722, 16
    $region441: #{tpu_custom_call.1} parent=1 // pred_fallthru
      _
    %s767 = sld [smem:[#allocation8 + $0x6]]
    %p768 = scmp.gt.s32.totalorder %s767, 0
    %s769 = scalar_select %p768, %s767, 0
    %p770 = scmp.lt.s32.totalorder %s769, 49
    %s771 = scalar_select %p770, %s769, 49
    %s772 = scalar_lea.vmem %s4, %s771
    %s773 = scalar_lea.vmem [#allocation3], 6
    %s774 = scalar_lea.sflag [#allocation4], 14
    %p776 = scmp.lt.u32.totalorder 1, 8
    %p777 = pneg %p776
    // Predicated region
    $region442: #{tpu_custom_call.1} parent=1 // pred_check
      _
    $region443: #{tpu_custom_call.1} parent=1 // pred_check_branch
      %779 = sbr.rel (%p776) target = $region445
    $region444: #{tpu_custom_call.1} parent=1 // pred_region
      %s794 = sand.u32 1, 7
      %p795 = scmp.eq.s32.totalorder %s794, 0
      %p796 = pneg %p795
      // Predicated region
      $region457: #{tpu_custom_call.1} parent=444 // pred_check
        _
      $region458: #{tpu_custom_call.1} parent=444 // pred_check_branch
        %798 = sbr.rel (%p795) target = $region460
      $region459: #{tpu_custom_call.1} parent=444 // pred_region
        %s799 = sand.u32 1, 7
        %s800 = ssub.s32 1, %s799
        %s801 = scalar_lea.vmem %s772, %s800
        %s802 = ssub.s32 1, %s799
        %s803 = scalar_lea.vmem %s773, %s802 [#allocation3]
        %s804 = sshllo.u32 0, %s799
        loop: start=0, step=1, limit=1
        $region461: #{tpu_custom_call.1} parent=459 // loop_pre_header
          _
        $region462: #{tpu_custom_call.1} parent=459 // loop_header
          %s806 = sphi 0, %s810
          %p807 = scmp.ge.s32.totalorder %s806, 1
          %s811 = sphi %s801, %s801
          %s812 = sphi %s803, %s803
        $region463: #{tpu_custom_call.1} parent=459 // loop_header_branch
          %809 = sbr.rel (%p807) target = $region467
        $region464: #{tpu_custom_call.1} parent=459 // loop_body
          %v813 = vld [vmem:[%s811] sm:%s804]
          %814 = vst [vmem:[%s812] sm:%s804] %v813
        $region465: #{tpu_custom_call.1} parent=459 // loop_footer
          %s810 = sadd.s32 1, %s806
        $region466: #{tpu_custom_call.1} parent=459 // loop_footer_branch
          %805 = sbr.rel target = $region462
        $region467: #{tpu_custom_call.1} parent=459 // loop_exit
          _
      $region460: #{tpu_custom_call.1} parent=444 // pred_fallthru
        _
    $region445: #{tpu_custom_call.1} parent=1 // pred_fallthru
      _
    // Predicated region
    $region446: #{tpu_custom_call.1} parent=1 // pred_check
      %p780 = pneg %p776
    $region447: #{tpu_custom_call.1} parent=1 // pred_check_branch
      %782 = sbr.rel (%p780) target = $region449
    $region448: #{tpu_custom_call.1} parent=1 // pred_region
      %s783 = sshllo.u32 0, 1
      loop: start=0, step=1, limit=1
      $region450: #{tpu_custom_call.1} parent=448 // loop_pre_header
        _
      $region451: #{tpu_custom_call.1} parent=448 // loop_header
        %s785 = sphi 0, %s789
        %p786 = scmp.ge.s32.totalorder %s785, 1
        %s790 = sphi %s772, %s772
        %s791 = sphi %s773, %s773
      $region452: #{tpu_custom_call.1} parent=448 // loop_header_branch
        %788 = sbr.rel (%p786) target = $region456
      $region453: #{tpu_custom_call.1} parent=448 // loop_body
        %v792 = vld [vmem:[%s790] sm:%s783]
        %793 = vst [vmem:[%s791] sm:%s783] %v792
      $region454: #{tpu_custom_call.1} parent=448 // loop_footer
        %s789 = sadd.s32 1, %s785
      $region455: #{tpu_custom_call.1} parent=448 // loop_footer_branch
        %784 = sbr.rel target = $region451
      $region456: #{tpu_custom_call.1} parent=448 // loop_exit
        _
    $region449: #{tpu_custom_call.1} parent=1 // pred_fallthru
      _
    // Predicated region
    $region468: #{tpu_custom_call.1} parent=1 // pred_check
      _
    $region469: #{tpu_custom_call.1} parent=1 // pred_check_branch
      %817 = sbr.rel (0) target = $region471
    $region470: #{tpu_custom_call.1} parent=1 // pred_region
      %818 = vsyncadd %s774, 16
    $region471: #{tpu_custom_call.1} parent=1 // pred_fallthru
      _
    %s819 = sld [smem:[#allocation8 + $0x7]]
    %p820 = scmp.gt.s32.totalorder %s819, 0
    %s821 = scalar_select %p820, %s819, 0
    %p822 = scmp.lt.s32.totalorder %s821, 49
    %s823 = scalar_select %p822, %s821, 49
    %s824 = scalar_lea.vmem %s4, %s823
    %s825 = scalar_lea.vmem [#allocation3], 7
    %s826 = scalar_lea.sflag [#allocation4], 15
    %p828 = scmp.lt.u32.totalorder 1, 8
    %p829 = pneg %p828
    // Predicated region
    $region472: #{tpu_custom_call.1} parent=1 // pred_check
      _
    $region473: #{tpu_custom_call.1} parent=1 // pred_check_branch
      %831 = sbr.rel (%p828) target = $region475
    $region474: #{tpu_custom_call.1} parent=1 // pred_region
      %s846 = sand.u32 1, 7
      %p847 = scmp.eq.s32.totalorder %s846, 0
      %p848 = pneg %p847
      // Predicated region
      $region487: #{tpu_custom_call.1} parent=474 // pred_check
        _
      $region488: #{tpu_custom_call.1} parent=474 // pred_check_branch
        %850 = sbr.rel (%p847) target = $region490
      $region489: #{tpu_custom_call.1} parent=474 // pred_region
        %s851 = sand.u32 1, 7
        %s852 = ssub.s32 1, %s851
        %s853 = scalar_lea.vmem %s824, %s852
        %s854 = ssub.s32 1, %s851
        %s855 = scalar_lea.vmem %s825, %s854 [#allocation3]
        %s856 = sshllo.u32 0, %s851
        loop: start=0, step=1, limit=1
        $region491: #{tpu_custom_call.1} parent=489 // loop_pre_header
          _
        $region492: #{tpu_custom_call.1} parent=489 // loop_header
          %s858 = sphi 0, %s862
          %p859 = scmp.ge.s32.totalorder %s858, 1
          %s863 = sphi %s853, %s853
          %s864 = sphi %s855, %s855
        $region493: #{tpu_custom_call.1} parent=489 // loop_header_branch
          %861 = sbr.rel (%p859) target = $region497
        $region494: #{tpu_custom_call.1} parent=489 // loop_body
          %v865 = vld [vmem:[%s863] sm:%s856]
          %866 = vst [vmem:[%s864] sm:%s856] %v865
        $region495: #{tpu_custom_call.1} parent=489 // loop_footer
          %s862 = sadd.s32 1, %s858
        $region496: #{tpu_custom_call.1} parent=489 // loop_footer_branch
          %857 = sbr.rel target = $region492
        $region497: #{tpu_custom_call.1} parent=489 // loop_exit
          _
      $region490: #{tpu_custom_call.1} parent=474 // pred_fallthru
        _
    $region475: #{tpu_custom_call.1} parent=1 // pred_fallthru
      _
    // Predicated region
    $region476: #{tpu_custom_call.1} parent=1 // pred_check
      %p832 = pneg %p828
    $region477: #{tpu_custom_call.1} parent=1 // pred_check_branch
      %834 = sbr.rel (%p832) target = $region479
    $region478: #{tpu_custom_call.1} parent=1 // pred_region
      %s835 = sshllo.u32 0, 1
      loop: start=0, step=1, limit=1
      $region480: #{tpu_custom_call.1} parent=478 // loop_pre_header
        _
      $region481: #{tpu_custom_call.1} parent=478 // loop_header
        %s837 = sphi 0, %s841
        %p838 = scmp.ge.s32.totalorder %s837, 1
        %s842 = sphi %s824, %s824
        %s843 = sphi %s825, %s825
      $region482: #{tpu_custom_call.1} parent=478 // loop_header_branch
        %840 = sbr.rel (%p838) target = $region486
      $region483: #{tpu_custom_call.1} parent=478 // loop_body
        %v844 = vld [vmem:[%s842] sm:%s835]
        %845 = vst [vmem:[%s843] sm:%s835] %v844
      $region484: #{tpu_custom_call.1} parent=478 // loop_footer
        %s841 = sadd.s32 1, %s837
      $region485: #{tpu_custom_call.1} parent=478 // loop_footer_branch
        %836 = sbr.rel target = $region481
      $region486: #{tpu_custom_call.1} parent=478 // loop_exit
        _
    $region479: #{tpu_custom_call.1} parent=1 // pred_fallthru
      _
    // Predicated region
    $region498: #{tpu_custom_call.1} parent=1 // pred_check
      _
    $region499: #{tpu_custom_call.1} parent=1 // pred_check_branch
      %869 = sbr.rel (0) target = $region501
    $region500: #{tpu_custom_call.1} parent=1 // pred_region
      %870 = vsyncadd %s826, 16
    $region501: #{tpu_custom_call.1} parent=1 // pred_fallthru
      _
    %s871 = smul.u32 1, 1
    %s872 = sshll.u32 %s871, 4
    %873 = dma.done [#allocation4], %s872
    %s874 = sshll.u32 %s871, 4
    %875 = dma.done %s99, %s874
    %s876 = sshll.u32 %s871, 4
    %877 = dma.done %s151, %s876
    %s878 = sshll.u32 %s871, 4
    %879 = dma.done %s203, %s878
    %s880 = sshll.u32 %s871, 4
    %881 = dma.done %s255, %s880
    %s882 = sshll.u32 %s871, 4
    %883 = dma.done %s307, %s882
    %s884 = sshll.u32 %s871, 4
    %885 = dma.done %s359, %s884
    %s886 = sshll.u32 %s871, 4
    %887 = dma.done %s411, %s886
    %s888 = sshll.u32 %s871, 4
    %889 = dma.done %s462, %s888
    %s890 = sshll.u32 %s871, 4
    %891 = dma.done %s514, %s890
    %s892 = sshll.u32 %s871, 4
    %893 = dma.done %s566, %s892
    %s894 = sshll.u32 %s871, 4
    %895 = dma.done %s618, %s894
    %s896 = sshll.u32 %s871, 4
    %897 = dma.done %s670, %s896
    %s898 = sshll.u32 %s871, 4
    %899 = dma.done %s722, %s898
    %s900 = sshll.u32 %s871, 4
    %901 = dma.done %s774, %s900
    %s902 = sshll.u32 %s871, 4
    %903 = dma.done %s826, %s902
    %v904 = vld [vmem:[#allocation2] sm:$0xff]
    %vm905 = vcmask 261120
    %v906 = vsel %vm905, %v904, 0.0
    %v907 = vrot.slane %v906, 4
    %v908 = vadd.f32 %v906, %v907
    %v909 = vrot.slane %v908, 2
    %v910 = vadd.f32 %v908, %v909
    %v911 = vrot.slane %v910, 1
    %v912 = vadd.f32 %v910, %v911
    %v913 = vld [vmem:[#allocation3] sm:$0xff]
    %v914 = vmul.f32 %v912, %v913
    %v915 = vsel %vm905, %v914, 0.0
    %916 = vadd.xlane.f32.xlu0 %v915
    %v917 = vpop.xlane.xlu0 %916
    %v918 = vld [vmem:[%s2] sm:$0xff]
    %v919 = vmul.f32 %v918, 2.0
    %v920 = vsub.f32 1.0, %v919
    %v921 = vmul.f32 %v920, %v917
    %v922 = vmax.f32 %v921, 0.0
    %v923 = vand.u32 2147483647, %v921
    %v924 = vsub.f32 0.0, %v923
    %v925 = vmul.f32 %v924, 1.442695
    %v926 = vpow.pop %v925
    %v927 = vadd.f32 %v926, 1.0
    %v928 = vlog2.pop %v927
    %v929 = vmul.f32 %v928, 0.6931472
    %v930 = vmul.f32 -0.5, %v926
    %v931 = vadd.f32 %v930, 1.0
    %v932 = vmul.f32 %v931, %v926
    %v933 = vand.u32 2147483647, %v926
    %vm934 = vcmp.lt.f32.partialorder %v933, 0.0004427343
    %v935 = vsel %vm934, %v932, %v929
    %v936 = vadd.f32 %v922, %v935
    %v937 = vsub.f32 0.0, %v936
    %vm938 = vcmask 7168
    %v939 = vsel %vm938, %v937, 0.0
    %v940 = vrot.slane %v939, 4
    %v941 = vadd.f32 %v939, %v940
    %v942 = vrot.slane %v941, 2
    %v943 = vadd.f32 %v941, %v942
    %v944 = vrot.slane %v943, 1
    %v945 = vadd.f32 %v943, %v944
    %vm946 = vcmask 0
    %947 = vst.msk [vmem:[#allocation10] sm:$0x1] %vm946, %v945
    // Predicated region
    $region502: #{tpu_custom_call.1} parent=1 // pred_check
      _
    $region503: #{tpu_custom_call.1} parent=1 // pred_check_branch
      %949 = sbr.rel (0) target = $region505
    $region504: #{tpu_custom_call.1} parent=1 // pred_region
      %s951 = ssub.s32 16, 16
      %952 = vsyncadd [#allocation6], %s951
      %s954 = sshll.u32 [#allocation10], 4
      %s955 = int_to_ptr.vmem [resolvable:$true] %s954
      %957 = dma.vmem_to_hbm [thread:$0]  %s955, 16, %s5, [#allocation6]
    $region505: #{tpu_custom_call.1} parent=1 // pred_fallthru
      _
    // Predicated region
    $region506: #{tpu_custom_call.1} parent=1 // pred_check
      _
    $region507: #{tpu_custom_call.1} parent=1 // pred_check_branch
      %959 = sbr.rel (0) target = $region509
    $region508: #{tpu_custom_call.1} parent=1 // pred_region
      %960 = dma.done [#allocation6], 16
    $region509: #{tpu_custom_call.1} parent=1 // pred_fallthru
      _
    %961 = vsyncpa [#allocation6], 1
    %962 = vsyncpa [#allocation7], 1
    %963 = vsyncpa [#allocation9], 1
  %964 = vsyncmov [#allocation4]
  %s965 = vpop.sfrf %964
  %p966 = scmp.eq.s32.totalorder %s965, 0
  %p967 = pneg %p966
  %969 = shalt.err (%p967)
  %s970 = scalar_lea.sflag [#allocation4], 1
  %971 = vsyncmov %s970
  %s972 = vpop.sfrf %971
  %p973 = scmp.eq.s32.totalorder %s972, 0
  %p974 = pneg %p973
  %976 = shalt.err (%p974)
  %s977 = scalar_lea.sflag [#allocation4], 2
  %978 = vsyncmov %s977
  %s979 = vpop.sfrf %978
  %p980 = scmp.eq.s32.totalorder %s979, 0
  %p981 = pneg %p980
  %983 = shalt.err (%p981)
  %s984 = scalar_lea.sflag [#allocation4], 3
  %985 = vsyncmov %s984
  %s986 = vpop.sfrf %985
  %p987 = scmp.eq.s32.totalorder %s986, 0
  %p988 = pneg %p987
  %990 = shalt.err (%p988)
  %s991 = scalar_lea.sflag [#allocation4], 4
  %992 = vsyncmov %s991
  %s993 = vpop.sfrf %992
  %p994 = scmp.eq.s32.totalorder %s993, 0
  %p995 = pneg %p994
  %997 = shalt.err (%p995)
  %s998 = scalar_lea.sflag [#allocation4], 5
  %999 = vsyncmov %s998
  %s1000 = vpop.sfrf %999
  %p1001 = scmp.eq.s32.totalorder %s1000, 0
  %p1002 = pneg %p1001
  %1004 = shalt.err (%p1002)
  %s1005 = scalar_lea.sflag [#allocation4], 6
  %1006 = vsyncmov %s1005
  %s1007 = vpop.sfrf %1006
  %p1008 = scmp.eq.s32.totalorder %s1007, 0
  %p1009 = pneg %p1008
  %1011 = shalt.err (%p1009)
  %s1012 = scalar_lea.sflag [#allocation4], 7
  %1013 = vsyncmov %s1012
  %s1014 = vpop.sfrf %1013
  %p1015 = scmp.eq.s32.totalorder %s1014, 0
  %p1016 = pneg %p1015
  %1018 = shalt.err (%p1016)
  %s1019 = scalar_lea.sflag [#allocation4], 8
  %1020 = vsyncmov %s1019
  %s1021 = vpop.sfrf %1020
  %p1022 = scmp.eq.s32.totalorder %s1021, 0
  %p1023 = pneg %p1022
  %1025 = shalt.err (%p1023)
  %s1026 = scalar_lea.sflag [#allocation4], 9
  %1027 = vsyncmov %s1026
  %s1028 = vpop.sfrf %1027
  %p1029 = scmp.eq.s32.totalorder %s1028, 0
  %p1030 = pneg %p1029
  %1032 = shalt.err (%p1030)
  %s1033 = scalar_lea.sflag [#allocation4], 10
  %1034 = vsyncmov %s1033
  %s1035 = vpop.sfrf %1034
  %p1036 = scmp.eq.s32.totalorder %s1035, 0
  %p1037 = pneg %p1036
  %1039 = shalt.err (%p1037)
  %s1040 = scalar_lea.sflag [#allocation4], 11
  %1041 = vsyncmov %s1040
  %s1042 = vpop.sfrf %1041
  %p1043 = scmp.eq.s32.totalorder %s1042, 0
  %p1044 = pneg %p1043
  %1046 = shalt.err (%p1044)
  %s1047 = scalar_lea.sflag [#allocation4], 12
  %1048 = vsyncmov %s1047
  %s1049 = vpop.sfrf %1048
  %p1050 = scmp.eq.s32.totalorder %s1049, 0
  %p1051 = pneg %p1050
  %1053 = shalt.err (%p1051)
  %s1054 = scalar_lea.sflag [#allocation4], 13
  %1055 = vsyncmov %s1054
  %s1056 = vpop.sfrf %1055
  %p1057 = scmp.eq.s32.totalorder %s1056, 0
  %p1058 = pneg %p1057
  %1060 = shalt.err (%p1058)
  %s1061 = scalar_lea.sflag [#allocation4], 14
  %1062 = vsyncmov %s1061
  %s1063 = vpop.sfrf %1062
  %p1064 = scmp.eq.s32.totalorder %s1063, 0
  %p1065 = pneg %p1064
  %1067 = shalt.err (%p1065)
  %s1068 = scalar_lea.sflag [#allocation4], 15
  %1069 = vsyncmov %s1068
  %s1070 = vpop.sfrf %1069
  %p1071 = scmp.eq.s32.totalorder %s1070, 0
  %p1072 = pneg %p1071
  %1074 = shalt.err (%p1072)

</llo_original>
